<compile_context>
chip_gen: v6e
topology: v6e:2x2x1
jax: 0.10.0
libtpu: 0.0.40
codegen_flags: <defaults>
</compile_context>

<pallas_src>
import jax
import jax.numpy as jnp
from jax.experimental import pallas as pl
from jax.experimental.pallas import tpu as pltpu


# ---------------------------------------------------------------------------
# Kernels
# ---------------------------------------------------------------------------
def _lora_kernel(x_ref, wt_ref, b_ref, lbt_ref, lat_ref, o_ref):
    # x_ref:   (tm, K)  f32 input tile (cast to bf16 in-kernel; VPU is idle)
    # wt_ref:  (K, tn)  bf16 frozen linear weight, transposed
    # b_ref:   (1, tn)  f32 bias
    # lbt_ref: (K, r)   bf16 lora_b transposed
    # lat_ref: (r, tn)  f32 lora_a transposed, scale pre-folded
    # o_ref:   (tm, tn) output tile
    x = x_ref[...].astype(wt_ref.dtype)

    # Base frozen linear: x @ W.T  (bf16 MXU, f32 accumulation).
    base = jnp.dot(x, wt_ref[...], preferred_element_type=jnp.float32)

    # Low-rank path: (x @ lora_b.T) @ (scale * lora_a.T); keep the rank-r
    # intermediate in f32 (FLOP-negligible, better accuracy).
    xr = jnp.dot(x, lbt_ref[...], preferred_element_type=jnp.float32)
    lora = jnp.dot(xr, lat_ref[...], preferred_element_type=jnp.float32)

    o_ref[...] = (base + lora + b_ref[...]).astype(o_ref.dtype)


def _merged_kernel(x_ref, wt_ref, b_ref, o_ref):
    # Merged path: LoRA delta already folded into W.T.
    x = x_ref[...].astype(wt_ref.dtype)
    base = jnp.dot(x, wt_ref[...], preferred_element_type=jnp.float32)
    o_ref[...] = (base + b_ref[...]).astype(o_ref.dtype)


# ---------------------------------------------------------------------------
# One-time parameter prep (layout / dtype / scale folding)
# ---------------------------------------------------------------------------
def prepare_lora_params(w, b, lora_a, lora_b, scale, *, merge=False,
                        compute_dtype=jnp.bfloat16):
    """One-time layout/dtype prep for the frozen + LoRA parameters.

    Do this once outside the per-step forward: a per-call W transpose/cast
    costs as much HBM traffic as an entire forward.
    If merge=True the LoRA delta is folded into W (inference-only fast path);
    lbt/lat are returned as None and the kernel drops the LoRA dots.
    """
    if merge:
        w_eff = w + float(scale) * (lora_a @ lora_b)        # (N, K) f32
        wt = w_eff.T.astype(compute_dtype)                  # (K, N)
        lbt, lat = None, None
    else:
        wt = w.T.astype(compute_dtype)                      # (K, N)
        lbt = lora_b.T.astype(compute_dtype)                # (K, r)
        lat = (float(scale) * lora_a.T).astype(jnp.float32)  # (r, N), f32
    b2 = b.reshape(1, -1).astype(jnp.float32)               # (1, N)
    return wt, b2, lbt, lat


# ---------------------------------------------------------------------------
# Tiling heuristics
# ---------------------------------------------------------------------------
def _choose_tiles(M, K, N, device_kind):
    """Generation-aware (tm, tn) selection."""
    kind = device_kind.lower().replace(" ", "")
    dual_tc = ("v7" in kind) or ("tpu7" in kind)
    legacy = any(t in kind for t in ("v2", "v3", "v4", "v5"))

    # Row tile: fill the MXU M dim (256 on v6e/v7x, 128 on older); pad M up
    # instead of shrinking toward a degenerate tile.
    tm_cap = 128 if legacy else 256
    grid_m = max(1, -(-M // tm_cap))
    tm = -(-M // grid_m)
    tm = min(tm_cap, max(8, ((tm + 7) // 8) * 8))
    grid_m = -(-M // tm)

    # N tile: multiples of 128 that divide N (largest first); bound the
    # streamed W.T block to ~8 MiB of (double-buffered) VMEM.
    if N % 128 == 0:
        cands = [c for c in range(N, 0, -128) if N % c == 0]
    else:
        cands = [N]
    budget = 8 << 20
    tn = cands[-1]
    for c in cands:
        if K * c * 2 * 2 <= budget:   # bf16 block, 2 pipeline buffers
            tn = c
            break

    # Dual-TC v7x with a single M tile: split N across the two TensorCores
    # instead of M so the dominant W.T stream is not duplicated per core.
    if dual_tc and grid_m == 1 and tn == N and N % 128 == 0 and N >= 256:
        for c in cands:
            if c <= N // 2:
                tn = c
                break

    return tm, tn


# ---------------------------------------------------------------------------
# Forward wrapper
# ---------------------------------------------------------------------------
def lora_linear_forward(x, wt, b2, lbt=None, lat=None, *, tm=None, tn=None,
                        out_dtype=None):
    """x: (B, S, K) f32; wt: (K, N) bf16; b2: (1, N) f32;
    lbt: (K, r) bf16 or None; lat: (r, N) f32 or None (merged path)."""
    B, S, K = x.shape
    N = wt.shape[1]
    M = B * S
    merged = (lbt is None) or (lat is None)
    out_dtype = x.dtype if out_dtype is None else out_dtype

    auto_tm, auto_tn = _choose_tiles(M, K, N, jax.devices()[0].device_kind)
    tm = auto_tm if tm is None else tm
    tn = auto_tn if tn is None else tn
    assert N % tn == 0, "tn must divide N"

    grid_m = pl.cdiv(M, tm)
    grid_n = N // tn
    m_pad = grid_m * tm

    # Reshape is layout-free; pad rows only when M is awkward.
    x2 = x.reshape(M, K)
    if m_pad != M:
        x2 = jnp.pad(x2, ((0, m_pad - M), (0, 0)))

    def spec(shape, index_map, constant):
        # Constant-index blocks never change -> single buffer saves VMEM.
        if constant:
            return pl.BlockSpec(shape, index_map, pipeline_mode=pl.Buffered(1))
        return pl.BlockSpec(shape, index_map)

    in_specs = [
        spec((tm, K), lambda i, j: (i, 0), grid_m == 1),    # x (f32)
        spec((K, tn), lambda i, j: (0, j), grid_n == 1),    # W.T
        spec((1, tn), lambda i, j: (0, j), grid_n == 1),    # bias
    ]
    args = [x2, wt, b2]

    if merged:
        kernel = _merged_kernel
        lora_flops = 0
        lora_bytes = 0
    else:
        r = lbt.shape[1]
        in_specs += [
            spec((K, r), lambda i, j: (0, 0), True),        # lora_b.T
            spec((r, tn), lambda i, j: (0, j), grid_n == 1),  # scale*lora_a.T
        ]
        args += [lbt, lat]
        kernel = _lora_kernel
        lora_flops = 2 * M * K * r + 2 * M * r * N
        lora_bytes = K * r * lbt.dtype.itemsize + r * N * lat.dtype.itemsize

    cost = pl.CostEstimate(
        flops=2 * M * K * N + lora_flops,
        transcendentals=0,
        bytes_accessed=(M * K * x.dtype.itemsize          # x (f32)
                        + K * N * wt.dtype.itemsize       # W.T
                        + N * 4                           # bias
                        + lora_bytes
                        + M * N * jnp.dtype(out_dtype).itemsize),  # output
    )

    out2 = pl.pallas_call(
        kernel,
        out_shape=jax.ShapeDtypeStruct((m_pad, N), out_dtype),
        grid_spec=pltpu.PrefetchScalarGridSpec(
            num_scalar_prefetch=0,
            grid=(grid_m, grid_n),
            in_specs=in_specs,
            out_specs=pl.BlockSpec((tm, tn), lambda i, j: (i, j)),
        ),
        compiler_params=pltpu.CompilerParams(
            dimension_semantics=("parallel", "parallel"),
        ),
        cost_estimate=cost,
    )(*args)

    if m_pad != M:
        out2 = out2[:M]
    return out2.reshape(B, S, N)


# ---------------------------------------------------------------------------
# Self-test
# ---------------------------------------------------------------------------
if __name__ == "__main__":
    # Module hyper-parameters (from the PyTorch script), small batch/seq.
    in_features = 768
    out_features = 512
    rank = 8
    lora_alpha = 16
    scale = lora_alpha / rank

    batch_size = 2
    seq_len = 64   # batch*seq = 128 rows

    key = jax.random.PRNGKey(0)
    kx, kw, kb, ka, kb2 = jax.random.split(key, 5)

    x = jax.random.normal(kx, (batch_size, seq_len, in_features), jnp.float32)

    # Deterministic synthetic parameters (shapes match the nn.Module).
    bound = 1.0 / (in_features ** 0.5)
    w = jax.random.uniform(kw, (out_features, in_features), jnp.float32,
                           minval=-bound, maxval=bound)
    b = jax.random.uniform(kb, (out_features,), jnp.float32,
                           minval=-bound, maxval=bound)
    # lora_a ~ kaiming-normal-ish; lora_b random (the module inits it to zeros,
    # which would make the LoRA branch trivially zero) — kept deterministic.
    gain = (2.0 / (1.0 + 0.01 ** 2)) ** 0.5
    lora_a = gain / (rank ** 0.5) * jax.random.normal(
        ka, (out_features, rank), jnp.float32)
    lora_b = 0.02 * jax.random.normal(kb2, (rank, in_features), jnp.float32)

    # Pure-JAX f32 reference mirroring the PyTorch forward exactly.
    ref = (x @ w.T + b) + scale * (x @ (lora_a @ lora_b).T)

    # ---- merge=False path (the module's configuration) ----
    wt, b2, lbt, lat = prepare_lora_params(w, b, lora_a, lora_b, scale,
                                           merge=False)
    out = lora_linear_forward(x, wt, b2, lbt, lat)
    out = jax.block_until_ready(out)

    assert out.shape == (batch_size, seq_len, out_features)
    assert out.dtype == x.dtype
    # Tolerances loosened: bf16 matmul inputs (f32 MXU accumulation).
    assert jnp.allclose(out, ref, atol=3e-2, rtol=3e-2), "mismatch (lora path)"

    # ---- merged fast path (LoRA delta folded into W once) ----
    wt_m, b2_m, _, _ = prepare_lora_params(w, b, lora_a, lora_b, scale,
                                           merge=True)
    out_m = lora_linear_forward(x, wt_m, b2_m)
    out_m = jax.block_until_ready(out_m)
    assert jnp.allclose(out_m, ref, atol=3e-2, rtol=3e-2), "mismatch (merged)"

    print("KERNEL_OK")
</pallas_src>

<mosaic_0001>
module attributes {stable_mosaic.version = 11 : i64} {
  func.func @_lora_kernel(%arg0: i32, %arg1: i32, %arg2: memref<128x768xf32, #tpu.memory_space<vmem>>, %arg3: memref<768x512xbf16, #tpu.memory_space<vmem>>, %arg4: memref<1x512xf32, #tpu.memory_space<vmem>>, %arg5: memref<768x8xbf16, #tpu.memory_space<vmem>>, %arg6: memref<8x512xf32, #tpu.memory_space<vmem>>, %arg7: memref<128x512xf32, #tpu.memory_space<vmem>>) attributes {dimension_semantics = [#tpu.dimension_semantics<parallel>, #tpu.dimension_semantics<parallel>], iteration_bounds = array<i64: 1, 1>, scalar_prefetch = 0 : i64, scratch_operands = 0 : i64, tpu.core_type = #tpu.core_type<tc>, window_params = [{pipeline_mode = #tpu.pipeline_mode<synchronous>, transform_indices = @transform_0, window_bounds = array<i64: 128, 768>}, {pipeline_mode = #tpu.pipeline_mode<synchronous>, transform_indices = @transform_1, window_bounds = array<i64: 768, 512>}, {pipeline_mode = #tpu.pipeline_mode<synchronous>, transform_indices = @transform_2, window_bounds = array<i64: 1, 512>}, {pipeline_mode = #tpu.pipeline_mode<synchronous>, transform_indices = @transform_3, window_bounds = array<i64: 768, 8>}, {pipeline_mode = #tpu.pipeline_mode<synchronous>, transform_indices = @transform_4, window_bounds = array<i64: 8, 512>}, {transform_indices = @transform_5, window_bounds = array<i64: 128, 512>}]} {
    %c0 = arith.constant 0 : index
    %c0_0 = arith.constant 0 : index
    %0 = vector.load %arg2[%c0, %c0_0] : memref<128x768xf32, #tpu.memory_space<vmem>>, vector<128x768xf32>
    %1 = arith.truncf %0 : vector<128x768xf32> to vector<128x768xbf16>
    %c0_1 = arith.constant 0 : index
    %c0_2 = arith.constant 0 : index
    %2 = vector.load %arg3[%c0_1, %c0_2] : memref<768x512xbf16, #tpu.memory_space<vmem>>, vector<768x512xbf16>
    %cst = arith.constant dense<0.000000e+00> : vector<128x512xf32>
    %3 = tpu.matmul %1, %2, %cst {dimension_numbers = #tpu.dot_dimension_numbers<[1], [0], [0], [1], [0, 0, 1, 1], [], []>} : vector<128x768xbf16>, vector<768x512xbf16>, vector<128x512xf32> -> vector<128x512xf32>
    %c0_3 = arith.constant 0 : index
    %c0_4 = arith.constant 0 : index
    %4 = vector.load %arg5[%c0_3, %c0_4] : memref<768x8xbf16, #tpu.memory_space<vmem>>, vector<768x8xbf16>
    %cst_5 = arith.constant dense<0.000000e+00> : vector<128x8xf32>
    %5 = tpu.matmul %1, %4, %cst_5 {dimension_numbers = #tpu.dot_dimension_numbers<[1], [0], [0], [1], [0, 0, 1, 1], [], []>} : vector<128x768xbf16>, vector<768x8xbf16>, vector<128x8xf32> -> vector<128x8xf32>
    %c0_6 = arith.constant 0 : index
    %c0_7 = arith.constant 0 : index
    %6 = vector.load %arg6[%c0_6, %c0_7] : memref<8x512xf32, #tpu.memory_space<vmem>>, vector<8x512xf32>
    %cst_8 = arith.constant dense<0.000000e+00> : vector<128x512xf32>
    %7 = tpu.matmul %5, %6, %cst_8 {dimension_numbers = #tpu.dot_dimension_numbers<[1], [0], [0], [1], [0, 0, 1, 1], [], []>} : vector<128x8xf32>, vector<8x512xf32>, vector<128x512xf32> -> vector<128x512xf32>
    %8 = arith.addf %3, %7 : vector<128x512xf32>
    %c0_9 = arith.constant 0 : index
    %c0_10 = arith.constant 0 : index
    %9 = vector.load %arg4[%c0_9, %c0_10] : memref<1x512xf32, #tpu.memory_space<vmem>>, vector<1x512xf32>
    %10 = vector.broadcast %9 : vector<1x512xf32> to vector<128x512xf32>
    %11 = arith.addf %8, %10 : vector<128x512xf32>
    %c0_11 = arith.constant 0 : index
    %c0_12 = arith.constant 0 : index
    %12 = vector.load %arg7[%c0_11, %c0_12] : memref<128x512xf32, #tpu.memory_space<vmem>>, vector<128x512xf32>
    tpu.vector_store %arg7[%c0_11, %c0_12], %11 {strides = array<i32>} : memref<128x512xf32, #tpu.memory_space<vmem>>, vector<128x512xf32>,
    return
  }
  func.func @transform_0(%arg0: i32, %arg1: i32) -> (i32, i32) {
    %c0_i32 = arith.constant 0 : i32
    %c0_i32_0 = arith.constant 0 : i32
    return %arg0, %c0_i32 : i32, i32
  }
  func.func @transform_1(%arg0: i32, %arg1: i32) -> (i32, i32) {
    %c0_i32 = arith.constant 0 : i32
    %c0_i32_0 = arith.constant 0 : i32
    return %c0_i32, %arg1 : i32, i32
  }
  func.func @transform_2(%arg0: i32, %arg1: i32) -> (i32, i32) {
    %c0_i32 = arith.constant 0 : i32
    %c0_i32_0 = arith.constant 0 : i32
    return %c0_i32, %arg1 : i32, i32
  }
  func.func @transform_3(%arg0: i32, %arg1: i32) -> (i32, i32) {
    %c0_i32 = arith.constant 0 : i32
    %c0_i32_0 = arith.constant 0 : i32
    %c0_i32_1 = arith.constant 0 : i32
    return %c0_i32, %c0_i32_0 : i32, i32
  }
  func.func @transform_4(%arg0: i32, %arg1: i32) -> (i32, i32) {
    %c0_i32 = arith.constant 0 : i32
    %c0_i32_0 = arith.constant 0 : i32
    return %c0_i32, %arg1 : i32, i32
  }
  func.func @transform_5(%arg0: i32, %arg1: i32) -> (i32, i32) {
    %c0_i32 = arith.constant 0 : i32
    return %arg0, %arg1 : i32, i32
  }
}

</mosaic_0001>

<llo_original>
// kernel: tpu_custom_call.1
$region0: #{tpu_custom_call.1}
  #allocation0 [shape = 'u32[]', space=smem, size = 0x4, offset = 0x4, fixed_abs, tag = 'smem constant byte address 0x4 - core index']
  #allocation1 [shape = 'u32[144,128]{1,0:T(1,128)}', space=vmem, size = 0x12000, scoped, tag = 'internal scratch']
  %s0 = inlined_call_operand.hbm [shape: f32[128,768], index: 0, kind: input, shape index: {}]
  %s1 = inlined_call_operand.hbm [shape: bf16[768,512], index: 1, kind: input, shape index: {}]
  %s2 = inlined_call_operand.vmem [shape: f32[1,512], index: 2, kind: input, shape index: {}]
  %s3 = inlined_call_operand.vmem [shape: bf16[768,8], index: 3, kind: input, shape index: {}]
  %s4 = inlined_call_operand.vmem [shape: f32[8,512], index: 4, kind: input, shape index: {}]
  %s5 = inlined_call_operand.hbm [shape: f32[128,512], index: 5, kind: output, shape index: {}]
  %s6 = sld [smem:[#allocation0]]
  $region38: #{tpu_custom_call.1} parent=0
    _
  %s8 = ssub.s32 1, %s6
  %s9 = scalar_select 0, %s8, %s6
  $region1: #{tpu_custom_call.1} parent=0
    #allocation2 [shape = 'u8[393216]{0}', space=vmem, size = 0x60000, scoped, tag = 'input window, operand 0, single buffered']
    #allocation3 [shape = 's32[1]{0}', space=sflag, size = 0x4, scoped, tag = 'scoped memory for tpu_custom_call.1']
    #allocation4 [shape = 's32[1]{0}', space=sflag, size = 0x4, scoped, tag = 'scoped memory for tpu_custom_call.1']
    #allocation5 [shape = 'u8[786432]{0}', space=vmem, size = 0xc0000, scoped, tag = 'input window, operand 1, single buffered']
    #allocation6 [shape = 's32[1]{0}', space=sflag, size = 0x4, scoped, tag = 'scoped memory for tpu_custom_call.1']
    #allocation7 [shape = 'u8[262144]{0}', space=vmem, size = 0x40000, scoped, tag = 'output window, operand 0, single buffered']
    %10 = vsyncpa [#allocation3], 0
    %11 = vsyncpa [#allocation6], 0
    %12 = vsyncpa [#allocation4], 0
    // Predicated region
    $region2: #{tpu_custom_call.1} parent=1 // pred_check
      _
    $region3: #{tpu_custom_call.1} parent=1 // pred_check_branch
      %14 = sbr.rel (0) target = $region5
    $region4: #{tpu_custom_call.1} parent=1 // pred_region
      %s16 = ssub.s32 12288, 12288
      %17 = vsyncadd [#allocation3], %s16
      %s18 = sshll.u32 [#allocation2], 4
      %s19 = int_to_ptr.vmem [resolvable:$true] %s18
      %24 = dma.hbm_to_vmem [thread:$0]  %s0, 12288, %s19, [#allocation3], 768, 768, 48
    $region5: #{tpu_custom_call.1} parent=1 // pred_fallthru
      _
    // Predicated region
    $region6: #{tpu_custom_call.1} parent=1 // pred_check
      _
    $region7: #{tpu_custom_call.1} parent=1 // pred_check_branch
      %26 = sbr.rel (0) target = $region9
    $region8: #{tpu_custom_call.1} parent=1 // pred_region
      %s28 = ssub.s32 24576, 24576
      %29 = vsyncadd [#allocation6], %s28
      %s30 = sshll.u32 [#allocation5], 4
      %s31 = int_to_ptr.vmem [resolvable:$true] %s30
      %36 = dma.hbm_to_vmem [thread:$0]  %s1, 24576, %s31, [#allocation6], 256, 256, 16
    $region9: #{tpu_custom_call.1} parent=1 // pred_fallthru
      _
    // Predicated region
    $region10: #{tpu_custom_call.1} parent=1 // pred_check
      _
    $region11: #{tpu_custom_call.1} parent=1 // pred_check_branch
      %38 = sbr.rel (0) target = $region13
    $region12: #{tpu_custom_call.1} parent=1 // pred_region
      _
    $region13: #{tpu_custom_call.1} parent=1 // pred_fallthru
      _
    // Predicated region
    $region14: #{tpu_custom_call.1} parent=1 // pred_check
      _
    $region15: #{tpu_custom_call.1} parent=1 // pred_check_branch
      %40 = sbr.rel (0) target = $region17
    $region16: #{tpu_custom_call.1} parent=1 // pred_region
      _
    $region17: #{tpu_custom_call.1} parent=1 // pred_fallthru
      _
    // Predicated region
    $region18: #{tpu_custom_call.1} parent=1 // pred_check
      _
    $region19: #{tpu_custom_call.1} parent=1 // pred_check_branch
      %42 = sbr.rel (0) target = $region21
    $region20: #{tpu_custom_call.1} parent=1 // pred_region
      _
    $region21: #{tpu_custom_call.1} parent=1 // pred_fallthru
      _
    // Predicated region
    $region22: #{tpu_custom_call.1} parent=1 // pred_check
      _
    $region23: #{tpu_custom_call.1} parent=1 // pred_check_branch
      %44 = sbr.rel (0) target = $region25
    $region24: #{tpu_custom_call.1} parent=1 // pred_region
      %45 = dma.done [#allocation3], 12288
    $region25: #{tpu_custom_call.1} parent=1 // pred_fallthru
      _
    // Predicated region
    $region26: #{tpu_custom_call.1} parent=1 // pred_check
      _
    $region27: #{tpu_custom_call.1} parent=1 // pred_check_branch
      %47 = sbr.rel (0) target = $region29
    $region28: #{tpu_custom_call.1} parent=1 // pred_region
      %48 = dma.done [#allocation6], 24576
    $region29: #{tpu_custom_call.1} parent=1 // pred_fallthru
      _
    %v50 = vld [vmem:[#allocation2] sm:$0xff]
    %v51 = vld [vmem:[#allocation2 + $0x8] sm:$0xff]
    %v52 = vld [vmem:[#allocation2 + $0x10] sm:$0xff]
    %v53 = vld [vmem:[#allocation2 + $0x18] sm:$0xff]
    %v54 = vld [vmem:[#allocation2 + $0x20] sm:$0xff]
    %v55 = vld [vmem:[#allocation2 + $0x28] sm:$0xff]
    %v56 = vld [vmem:[#allocation2 + $0x30] sm:$0xff]
    %v57 = vld [vmem:[#allocation2 + $0x38] sm:$0xff]
    %v58 = vld [vmem:[#allocation2 + $0x40] sm:$0xff]
    %v59 = vld [vmem:[#allocation2 + $0x48] sm:$0xff]
    %v60 = vld [vmem:[#allocation2 + $0x50] sm:$0xff]
    %v61 = vld [vmem:[#allocation2 + $0x58] sm:$0xff]
    %v62 = vld [vmem:[#allocation2 + $0x60] sm:$0xff]
    %v63 = vld [vmem:[#allocation2 + $0x68] sm:$0xff]
    %v64 = vld [vmem:[#allocation2 + $0x70] sm:$0xff]
    %v65 = vld [vmem:[#allocation2 + $0x78] sm:$0xff]
    %v66 = vld [vmem:[#allocation2 + $0x80] sm:$0xff]
    %v67 = vld [vmem:[#allocation2 + $0x88] sm:$0xff]
    %v68 = vld [vmem:[#allocation2 + $0x90] sm:$0xff]
    %v69 = vld [vmem:[#allocation2 + $0x98] sm:$0xff]
    %v70 = vld [vmem:[#allocation2 + $0xa0] sm:$0xff]
    %v71 = vld [vmem:[#allocation2 + $0xa8] sm:$0xff]
    %v72 = vld [vmem:[#allocation2 + $0xb0] sm:$0xff]
    %v73 = vld [vmem:[#allocation2 + $0xb8] sm:$0xff]
    %v74 = vld [vmem:[#allocation2 + $0xc0] sm:$0xff]
    %v75 = vld [vmem:[#allocation2 + $0xc8] sm:$0xff]
    %v76 = vld [vmem:[#allocation2 + $0xd0] sm:$0xff]
    %v77 = vld [vmem:[#allocation2 + $0xd8] sm:$0xff]
    %v78 = vld [vmem:[#allocation2 + $0xe0] sm:$0xff]
    %v79 = vld [vmem:[#allocation2 + $0xe8] sm:$0xff]
    %v80 = vld [vmem:[#allocation2 + $0xf0] sm:$0xff]
    %v81 = vld [vmem:[#allocation2 + $0xf8] sm:$0xff]
    %v82 = vld [vmem:[#allocation2 + $0x100] sm:$0xff]
    %v83 = vld [vmem:[#allocation2 + $0x108] sm:$0xff]
    %v84 = vld [vmem:[#allocation2 + $0x110] sm:$0xff]
    %v85 = vld [vmem:[#allocation2 + $0x118] sm:$0xff]
    %v86 = vld [vmem:[#allocation2 + $0x120] sm:$0xff]
    %v87 = vld [vmem:[#allocation2 + $0x128] sm:$0xff]
    %v88 = vld [vmem:[#allocation2 + $0x130] sm:$0xff]
    %v89 = vld [vmem:[#allocation2 + $0x138] sm:$0xff]
    %v90 = vld [vmem:[#allocation2 + $0x140] sm:$0xff]
    %v91 = vld [vmem:[#allocation2 + $0x148] sm:$0xff]
    %v92 = vld [vmem:[#allocation2 + $0x150] sm:$0xff]
    %v93 = vld [vmem:[#allocation2 + $0x158] sm:$0xff]
    %v94 = vld [vmem:[#allocation2 + $0x160] sm:$0xff]
    %v95 = vld [vmem:[#allocation2 + $0x168] sm:$0xff]
    %v96 = vld [vmem:[#allocation2 + $0x170] sm:$0xff]
    %v97 = vld [vmem:[#allocation2 + $0x178] sm:$0xff]
    %v98 = vld [vmem:[#allocation2 + $0x180] sm:$0xff]
    %v99 = vld [vmem:[#allocation2 + $0x188] sm:$0xff]
    %v100 = vld [vmem:[#allocation2 + $0x190] sm:$0xff]
    %v101 = vld [vmem:[#allocation2 + $0x198] sm:$0xff]
    %v102 = vld [vmem:[#allocation2 + $0x1a0] sm:$0xff]
    %v103 = vld [vmem:[#allocation2 + $0x1a8] sm:$0xff]
    %v104 = vld [vmem:[#allocation2 + $0x1b0] sm:$0xff]
    %v105 = vld [vmem:[#allocation2 + $0x1b8] sm:$0xff]
    %v106 = vld [vmem:[#allocation2 + $0x1c0] sm:$0xff]
    %v107 = vld [vmem:[#allocation2 + $0x1c8] sm:$0xff]
    %v108 = vld [vmem:[#allocation2 + $0x1d0] sm:$0xff]
    %v109 = vld [vmem:[#allocation2 + $0x1d8] sm:$0xff]
    %v110 = vld [vmem:[#allocation2 + $0x1e0] sm:$0xff]
    %v111 = vld [vmem:[#allocation2 + $0x1e8] sm:$0xff]
    %v112 = vld [vmem:[#allocation2 + $0x1f0] sm:$0xff]
    %v113 = vld [vmem:[#allocation2 + $0x1f8] sm:$0xff]
    %v114 = vld [vmem:[#allocation2 + $0x200] sm:$0xff]
    %v115 = vld [vmem:[#allocation2 + $0x208] sm:$0xff]
    %v116 = vld [vmem:[#allocation2 + $0x210] sm:$0xff]
    %v117 = vld [vmem:[#allocation2 + $0x218] sm:$0xff]
    %v118 = vld [vmem:[#allocation2 + $0x220] sm:$0xff]
    %v119 = vld [vmem:[#allocation2 + $0x228] sm:$0xff]
    %v120 = vld [vmem:[#allocation2 + $0x230] sm:$0xff]
    %v121 = vld [vmem:[#allocation2 + $0x238] sm:$0xff]
    %v122 = vld [vmem:[#allocation2 + $0x240] sm:$0xff]
    %v123 = vld [vmem:[#allocation2 + $0x248] sm:$0xff]
    %v124 = vld [vmem:[#allocation2 + $0x250] sm:$0xff]
    %v125 = vld [vmem:[#allocation2 + $0x258] sm:$0xff]
    %v126 = vld [vmem:[#allocation2 + $0x260] sm:$0xff]
    %v127 = vld [vmem:[#allocation2 + $0x268] sm:$0xff]
    %v128 = vld [vmem:[#allocation2 + $0x270] sm:$0xff]
    %v129 = vld [vmem:[#allocation2 + $0x278] sm:$0xff]
    %v130 = vld [vmem:[#allocation2 + $0x280] sm:$0xff]
    %v131 = vld [vmem:[#allocation2 + $0x288] sm:$0xff]
    %v132 = vld [vmem:[#allocation2 + $0x290] sm:$0xff]
    %v133 = vld [vmem:[#allocation2 + $0x298] sm:$0xff]
    %v134 = vld [vmem:[#allocation2 + $0x2a0] sm:$0xff]
    %v135 = vld [vmem:[#allocation2 + $0x2a8] sm:$0xff]
    %v136 = vld [vmem:[#allocation2 + $0x2b0] sm:$0xff]
    %v137 = vld [vmem:[#allocation2 + $0x2b8] sm:$0xff]
    %v138 = vld [vmem:[#allocation2 + $0x2c0] sm:$0xff]
    %v139 = vld [vmem:[#allocation2 + $0x2c8] sm:$0xff]
    %v140 = vld [vmem:[#allocation2 + $0x2d0] sm:$0xff]
    %v141 = vld [vmem:[#allocation2 + $0x2d8] sm:$0xff]
    %v142 = vld [vmem:[#allocation2 + $0x2e0] sm:$0xff]
    %v143 = vld [vmem:[#allocation2 + $0x2e8] sm:$0xff]
    %v144 = vld [vmem:[#allocation2 + $0x2f0] sm:$0xff]
    %v145 = vld [vmem:[#allocation2 + $0x2f8] sm:$0xff]
    %v146 = vpack.c.bf16 %v56, %v50
    %v147 = vpack.c.bf16 %v57, %v51
    %v148 = vpack.c.bf16 %v58, %v52
    %v149 = vpack.c.bf16 %v59, %v53
    %v150 = vpack.c.bf16 %v60, %v54
    %v151 = vpack.c.bf16 %v61, %v55
    %v152 = vpack.c.bf16 %v68, %v62
    %v153 = vpack.c.bf16 %v69, %v63
    %v154 = vpack.c.bf16 %v70, %v64
    %v155 = vpack.c.bf16 %v71, %v65
    %v156 = vpack.c.bf16 %v72, %v66
    %v157 = vpack.c.bf16 %v73, %v67
    %v158 = vpack.c.bf16 %v80, %v74
    %v159 = vpack.c.bf16 %v81, %v75
    %v160 = vpack.c.bf16 %v82, %v76
    %v161 = vpack.c.bf16 %v83, %v77
    %v162 = vpack.c.bf16 %v84, %v78
    %v163 = vpack.c.bf16 %v85, %v79
    %v164 = vpack.c.bf16 %v92, %v86
    %v165 = vpack.c.bf16 %v93, %v87
    %v166 = vpack.c.bf16 %v94, %v88
    %v167 = vpack.c.bf16 %v95, %v89
    %v168 = vpack.c.bf16 %v96, %v90
    %v169 = vpack.c.bf16 %v97, %v91
    %v170 = vpack.c.bf16 %v104, %v98
    %v171 = vpack.c.bf16 %v105, %v99
    %v172 = vpack.c.bf16 %v106, %v100
    %v173 = vpack.c.bf16 %v107, %v101
    %v174 = vpack.c.bf16 %v108, %v102
    %v175 = vpack.c.bf16 %v109, %v103
    %v176 = vpack.c.bf16 %v116, %v110
    %v177 = vpack.c.bf16 %v117, %v111
    %v178 = vpack.c.bf16 %v118, %v112
    %v179 = vpack.c.bf16 %v119, %v113
    %v180 = vpack.c.bf16 %v120, %v114
    %v181 = vpack.c.bf16 %v121, %v115
    %v182 = vpack.c.bf16 %v128, %v122
    %v183 = vpack.c.bf16 %v129, %v123
    %v184 = vpack.c.bf16 %v130, %v124
    %v185 = vpack.c.bf16 %v131, %v125
    %v186 = vpack.c.bf16 %v132, %v126
    %v187 = vpack.c.bf16 %v133, %v127
    %v188 = vpack.c.bf16 %v140, %v134
    %v189 = vpack.c.bf16 %v141, %v135
    %v190 = vpack.c.bf16 %v142, %v136
    %v191 = vpack.c.bf16 %v143, %v137
    %v192 = vpack.c.bf16 %v144, %v138
    %v193 = vpack.c.bf16 %v145, %v139
    %v194 = vld [vmem:[#allocation5] sm:$0xff]
    %v195 = vld [vmem:[#allocation5 + $0x8] sm:$0xff]
    %v196 = vld [vmem:[#allocation5 + $0x10] sm:$0xff]
    %v197 = vld [vmem:[#allocation5 + $0x18] sm:$0xff]
    %v198 = vld [vmem:[#allocation5 + $0x20] sm:$0xff]
    %v199 = vld [vmem:[#allocation5 + $0x28] sm:$0xff]
    %v200 = vld [vmem:[#allocation5 + $0x30] sm:$0xff]
    %v201 = vld [vmem:[#allocation5 + $0x38] sm:$0xff]
    %v202 = vld [vmem:[#allocation5 + $0x40] sm:$0xff]
    %v203 = vld [vmem:[#allocation5 + $0x48] sm:$0xff]
    %v204 = vld [vmem:[#allocation5 + $0x50] sm:$0xff]
    %v205 = vld [vmem:[#allocation5 + $0x58] sm:$0xff]
    %v206 = vld [vmem:[#allocation5 + $0x60] sm:$0xff]
    %v207 = vld [vmem:[#allocation5 + $0x68] sm:$0xff]
    %v208 = vld [vmem:[#allocation5 + $0x70] sm:$0xff]
    %v209 = vld [vmem:[#allocation5 + $0x78] sm:$0xff]
    %v210 = vld [vmem:[#allocation5 + $0x80] sm:$0xff]
    %v211 = vld [vmem:[#allocation5 + $0x88] sm:$0xff]
    %v212 = vld [vmem:[#allocation5 + $0x90] sm:$0xff]
    %v213 = vld [vmem:[#allocation5 + $0x98] sm:$0xff]
    %v214 = vld [vmem:[#allocation5 + $0xa0] sm:$0xff]
    %v215 = vld [vmem:[#allocation5 + $0xa8] sm:$0xff]
    %v216 = vld [vmem:[#allocation5 + $0xb0] sm:$0xff]
    %v217 = vld [vmem:[#allocation5 + $0xb8] sm:$0xff]
    %v218 = vld [vmem:[#allocation5 + $0xc0] sm:$0xff]
    %v219 = vld [vmem:[#allocation5 + $0xc8] sm:$0xff]
    %v220 = vld [vmem:[#allocation5 + $0xd0] sm:$0xff]
    %v221 = vld [vmem:[#allocation5 + $0xd8] sm:$0xff]
    %v222 = vld [vmem:[#allocation5 + $0xe0] sm:$0xff]
    %v223 = vld [vmem:[#allocation5 + $0xe8] sm:$0xff]
    %v224 = vld [vmem:[#allocation5 + $0xf0] sm:$0xff]
    %v225 = vld [vmem:[#allocation5 + $0xf8] sm:$0xff]
    %v226 = vld [vmem:[#allocation5 + $0x100] sm:$0xff]
    %v227 = vld [vmem:[#allocation5 + $0x108] sm:$0xff]
    %v228 = vld [vmem:[#allocation5 + $0x110] sm:$0xff]
    %v229 = vld [vmem:[#allocation5 + $0x118] sm:$0xff]
    %v230 = vld [vmem:[#allocation5 + $0x120] sm:$0xff]
    %v231 = vld [vmem:[#allocation5 + $0x128] sm:$0xff]
    %v232 = vld [vmem:[#allocation5 + $0x130] sm:$0xff]
    %v233 = vld [vmem:[#allocation5 + $0x138] sm:$0xff]
    %v234 = vld [vmem:[#allocation5 + $0x140] sm:$0xff]
    %v235 = vld [vmem:[#allocation5 + $0x148] sm:$0xff]
    %v236 = vld [vmem:[#allocation5 + $0x150] sm:$0xff]
    %v237 = vld [vmem:[#allocation5 + $0x158] sm:$0xff]
    %v238 = vld [vmem:[#allocation5 + $0x160] sm:$0xff]
    %v239 = vld [vmem:[#allocation5 + $0x168] sm:$0xff]
    %v240 = vld [vmem:[#allocation5 + $0x170] sm:$0xff]
    %v241 = vld [vmem:[#allocation5 + $0x178] sm:$0xff]
    %v242 = vld [vmem:[#allocation5 + $0x180] sm:$0xff]
    %v243 = vld [vmem:[#allocation5 + $0x188] sm:$0xff]
    %v244 = vld [vmem:[#allocation5 + $0x190] sm:$0xff]
    %v245 = vld [vmem:[#allocation5 + $0x198] sm:$0xff]
    %v246 = vld [vmem:[#allocation5 + $0x1a0] sm:$0xff]
    %v247 = vld [vmem:[#allocation5 + $0x1a8] sm:$0xff]
    %v248 = vld [vmem:[#allocation5 + $0x1b0] sm:$0xff]
    %v249 = vld [vmem:[#allocation5 + $0x1b8] sm:$0xff]
    %v250 = vld [vmem:[#allocation5 + $0x1c0] sm:$0xff]
    %v251 = vld [vmem:[#allocation5 + $0x1c8] sm:$0xff]
    %v252 = vld [vmem:[#allocation5 + $0x1d0] sm:$0xff]
    %v253 = vld [vmem:[#allocation5 + $0x1d8] sm:$0xff]
    %v254 = vld [vmem:[#allocation5 + $0x1e0] sm:$0xff]
    %v255 = vld [vmem:[#allocation5 + $0x1e8] sm:$0xff]
    %v256 = vld [vmem:[#allocation5 + $0x1f0] sm:$0xff]
    %v257 = vld [vmem:[#allocation5 + $0x1f8] sm:$0xff]
    %v258 = vld [vmem:[#allocation5 + $0x200] sm:$0xff]
    %v259 = vld [vmem:[#allocation5 + $0x208] sm:$0xff]
    %v260 = vld [vmem:[#allocation5 + $0x210] sm:$0xff]
    %v261 = vld [vmem:[#allocation5 + $0x218] sm:$0xff]
    %v262 = vld [vmem:[#allocation5 + $0x220] sm:$0xff]
    %v263 = vld [vmem:[#allocation5 + $0x228] sm:$0xff]
    %v264 = vld [vmem:[#allocation5 + $0x230] sm:$0xff]
    %v265 = vld [vmem:[#allocation5 + $0x238] sm:$0xff]
    %v266 = vld [vmem:[#allocation5 + $0x240] sm:$0xff]
    %v267 = vld [vmem:[#allocation5 + $0x248] sm:$0xff]
    %v268 = vld [vmem:[#allocation5 + $0x250] sm:$0xff]
    %v269 = vld [vmem:[#allocation5 + $0x258] sm:$0xff]
    %v270 = vld [vmem:[#allocation5 + $0x260] sm:$0xff]
    %v271 = vld [vmem:[#allocation5 + $0x268] sm:$0xff]
    %v272 = vld [vmem:[#allocation5 + $0x270] sm:$0xff]
    %v273 = vld [vmem:[#allocation5 + $0x278] sm:$0xff]
    %v274 = vld [vmem:[#allocation5 + $0x280] sm:$0xff]
    %v275 = vld [vmem:[#allocation5 + $0x288] sm:$0xff]
    %v276 = vld [vmem:[#allocation5 + $0x290] sm:$0xff]
    %v277 = vld [vmem:[#allocation5 + $0x298] sm:$0xff]
    %v278 = vld [vmem:[#allocation5 + $0x2a0] sm:$0xff]
    %v279 = vld [vmem:[#allocation5 + $0x2a8] sm:$0xff]
    %v280 = vld [vmem:[#allocation5 + $0x2b0] sm:$0xff]
    %v281 = vld [vmem:[#allocation5 + $0x2b8] sm:$0xff]
    %v282 = vld [vmem:[#allocation5 + $0x2c0] sm:$0xff]
    %v283 = vld [vmem:[#allocation5 + $0x2c8] sm:$0xff]
    %v284 = vld [vmem:[#allocation5 + $0x2d0] sm:$0xff]
    %v285 = vld [vmem:[#allocation5 + $0x2d8] sm:$0xff]
    %v286 = vld [vmem:[#allocation5 + $0x2e0] sm:$0xff]
    %v287 = vld [vmem:[#allocation5 + $0x2e8] sm:$0xff]
    %v288 = vld [vmem:[#allocation5 + $0x2f0] sm:$0xff]
    %v289 = vld [vmem:[#allocation5 + $0x2f8] sm:$0xff]
    %v290 = vld [vmem:[#allocation5 + $0x300] sm:$0xff]
    %v291 = vld [vmem:[#allocation5 + $0x308] sm:$0xff]
    %v292 = vld [vmem:[#allocation5 + $0x310] sm:$0xff]
    %v293 = vld [vmem:[#allocation5 + $0x318] sm:$0xff]
    %v294 = vld [vmem:[#allocation5 + $0x320] sm:$0xff]
    %v295 = vld [vmem:[#allocation5 + $0x328] sm:$0xff]
    %v296 = vld [vmem:[#allocation5 + $0x330] sm:$0xff]
    %v297 = vld [vmem:[#allocation5 + $0x338] sm:$0xff]
    %v298 = vld [vmem:[#allocation5 + $0x340] sm:$0xff]
    %v299 = vld [vmem:[#allocation5 + $0x348] sm:$0xff]
    %v300 = vld [vmem:[#allocation5 + $0x350] sm:$0xff]
    %v301 = vld [vmem:[#allocation5 + $0x358] sm:$0xff]
    %v302 = vld [vmem:[#allocation5 + $0x360] sm:$0xff]
    %v303 = vld [vmem:[#allocation5 + $0x368] sm:$0xff]
    %v304 = vld [vmem:[#allocation5 + $0x370] sm:$0xff]
    %v305 = vld [vmem:[#allocation5 + $0x378] sm:$0xff]
    %v306 = vld [vmem:[#allocation5 + $0x380] sm:$0xff]
    %v307 = vld [vmem:[#allocation5 + $0x388] sm:$0xff]
    %v308 = vld [vmem:[#allocation5 + $0x390] sm:$0xff]
    %v309 = vld [vmem:[#allocation5 + $0x398] sm:$0xff]
    %v310 = vld [vmem:[#allocation5 + $0x3a0] sm:$0xff]
    %v311 = vld [vmem:[#allocation5 + $0x3a8] sm:$0xff]
    %v312 = vld [vmem:[#allocation5 + $0x3b0] sm:$0xff]
    %v313 = vld [vmem:[#allocation5 + $0x3b8] sm:$0xff]
    %v314 = vld [vmem:[#allocation5 + $0x3c0] sm:$0xff]
    %v315 = vld [vmem:[#allocation5 + $0x3c8] sm:$0xff]
    %v316 = vld [vmem:[#allocation5 + $0x3d0] sm:$0xff]
    %v317 = vld [vmem:[#allocation5 + $0x3d8] sm:$0xff]
    %v318 = vld [vmem:[#allocation5 + $0x3e0] sm:$0xff]
    %v319 = vld [vmem:[#allocation5 + $0x3e8] sm:$0xff]
    %v320 = vld [vmem:[#allocation5 + $0x3f0] sm:$0xff]
    %v321 = vld [vmem:[#allocation5 + $0x3f8] sm:$0xff]
    %v322 = vld [vmem:[#allocation5 + $0x400] sm:$0xff]
    %v323 = vld [vmem:[#allocation5 + $0x408] sm:$0xff]
    %v324 = vld [vmem:[#allocation5 + $0x410] sm:$0xff]
    %v325 = vld [vmem:[#allocation5 + $0x418] sm:$0xff]
    %v326 = vld [vmem:[#allocation5 + $0x420] sm:$0xff]
    %v327 = vld [vmem:[#allocation5 + $0x428] sm:$0xff]
    %v328 = vld [vmem:[#allocation5 + $0x430] sm:$0xff]
    %v329 = vld [vmem:[#allocation5 + $0x438] sm:$0xff]
    %v330 = vld [vmem:[#allocation5 + $0x440] sm:$0xff]
    %v331 = vld [vmem:[#allocation5 + $0x448] sm:$0xff]
    %v332 = vld [vmem:[#allocation5 + $0x450] sm:$0xff]
    %v333 = vld [vmem:[#allocation5 + $0x458] sm:$0xff]
    %v334 = vld [vmem:[#allocation5 + $0x460] sm:$0xff]
    %v335 = vld [vmem:[#allocation5 + $0x468] sm:$0xff]
    %v336 = vld [vmem:[#allocation5 + $0x470] sm:$0xff]
    %v337 = vld [vmem:[#allocation5 + $0x478] sm:$0xff]
    %v338 = vld [vmem:[#allocation5 + $0x480] sm:$0xff]
    %v339 = vld [vmem:[#allocation5 + $0x488] sm:$0xff]
    %v340 = vld [vmem:[#allocation5 + $0x490] sm:$0xff]
    %v341 = vld [vmem:[#allocation5 + $0x498] sm:$0xff]
    %v342 = vld [vmem:[#allocation5 + $0x4a0] sm:$0xff]
    %v343 = vld [vmem:[#allocation5 + $0x4a8] sm:$0xff]
    %v344 = vld [vmem:[#allocation5 + $0x4b0] sm:$0xff]
    %v345 = vld [vmem:[#allocation5 + $0x4b8] sm:$0xff]
    %v346 = vld [vmem:[#allocation5 + $0x4c0] sm:$0xff]
    %v347 = vld [vmem:[#allocation5 + $0x4c8] sm:$0xff]
    %v348 = vld [vmem:[#allocation5 + $0x4d0] sm:$0xff]
    %v349 = vld [vmem:[#allocation5 + $0x4d8] sm:$0xff]
    %v350 = vld [vmem:[#allocation5 + $0x4e0] sm:$0xff]
    %v351 = vld [vmem:[#allocation5 + $0x4e8] sm:$0xff]
    %v352 = vld [vmem:[#allocation5 + $0x4f0] sm:$0xff]
    %v353 = vld [vmem:[#allocation5 + $0x4f8] sm:$0xff]
    %v354 = vld [vmem:[#allocation5 + $0x500] sm:$0xff]
    %v355 = vld [vmem:[#allocation5 + $0x508] sm:$0xff]
    %v356 = vld [vmem:[#allocation5 + $0x510] sm:$0xff]
    %v357 = vld [vmem:[#allocation5 + $0x518] sm:$0xff]
    %v358 = vld [vmem:[#allocation5 + $0x520] sm:$0xff]
    %v359 = vld [vmem:[#allocation5 + $0x528] sm:$0xff]
    %v360 = vld [vmem:[#allocation5 + $0x530] sm:$0xff]
    %v361 = vld [vmem:[#allocation5 + $0x538] sm:$0xff]
    %v362 = vld [vmem:[#allocation5 + $0x540] sm:$0xff]
    %v363 = vld [vmem:[#allocation5 + $0x548] sm:$0xff]
    %v364 = vld [vmem:[#allocation5 + $0x550] sm:$0xff]
    %v365 = vld [vmem:[#allocation5 + $0x558] sm:$0xff]
    %v366 = vld [vmem:[#allocation5 + $0x560] sm:$0xff]
    %v367 = vld [vmem:[#allocation5 + $0x568] sm:$0xff]
    %v368 = vld [vmem:[#allocation5 + $0x570] sm:$0xff]
    %v369 = vld [vmem:[#allocation5 + $0x578] sm:$0xff]
    %v370 = vld [vmem:[#allocation5 + $0x580] sm:$0xff]
    %v371 = vld [vmem:[#allocation5 + $0x588] sm:$0xff]
    %v372 = vld [vmem:[#allocation5 + $0x590] sm:$0xff]
    %v373 = vld [vmem:[#allocation5 + $0x598] sm:$0xff]
    %v374 = vld [vmem:[#allocation5 + $0x5a0] sm:$0xff]
    %v375 = vld [vmem:[#allocation5 + $0x5a8] sm:$0xff]
    %v376 = vld [vmem:[#allocation5 + $0x5b0] sm:$0xff]
    %v377 = vld [vmem:[#allocation5 + $0x5b8] sm:$0xff]
    %v378 = vld [vmem:[#allocation5 + $0x5c0] sm:$0xff]
    %v379 = vld [vmem:[#allocation5 + $0x5c8] sm:$0xff]
    %v380 = vld [vmem:[#allocation5 + $0x5d0] sm:$0xff]
    %v381 = vld [vmem:[#allocation5 + $0x5d8] sm:$0xff]
    %v382 = vld [vmem:[#allocation5 + $0x5e0] sm:$0xff]
    %v383 = vld [vmem:[#allocation5 + $0x5e8] sm:$0xff]
    %v384 = vld [vmem:[#allocation5 + $0x5f0] sm:$0xff]
    %v385 = vld [vmem:[#allocation5 + $0x5f8] sm:$0xff]
    %v386 = vld [vmem:[%s3] sm:$0xf]
    %v387 = vld [vmem:[%s3 + $0x4] sm:$0xf]
    %v388 = vld [vmem:[%s3 + $0x8] sm:$0xf]
    %v389 = vld [vmem:[%s3 + $0xc] sm:$0xf]
    %v390 = vld [vmem:[%s3 + $0x10] sm:$0xf]
    %v391 = vld [vmem:[%s3 + $0x14] sm:$0xf]
    %v392 = vld [vmem:[%s3 + $0x18] sm:$0xf]
    %v393 = vld [vmem:[%s3 + $0x1c] sm:$0xf]
    %v394 = vld [vmem:[%s3 + $0x20] sm:$0xf]
    %v395 = vld [vmem:[%s3 + $0x24] sm:$0xf]
    %v396 = vld [vmem:[%s3 + $0x28] sm:$0xf]
    %v397 = vld [vmem:[%s3 + $0x2c] sm:$0xf]
    %v398 = vld [vmem:[%s3 + $0x30] sm:$0xf]
    %v399 = vld [vmem:[%s3 + $0x34] sm:$0xf]
    %v400 = vld [vmem:[%s3 + $0x38] sm:$0xf]
    %v401 = vld [vmem:[%s3 + $0x3c] sm:$0xf]
    %v402 = vld [vmem:[%s3 + $0x40] sm:$0xf]
    %v403 = vld [vmem:[%s3 + $0x44] sm:$0xf]
    %v404 = vld [vmem:[%s3 + $0x48] sm:$0xf]
    %v405 = vld [vmem:[%s3 + $0x4c] sm:$0xf]
    %v406 = vld [vmem:[%s3 + $0x50] sm:$0xf]
    %v407 = vld [vmem:[%s3 + $0x54] sm:$0xf]
    %v408 = vld [vmem:[%s3 + $0x58] sm:$0xf]
    %v409 = vld [vmem:[%s3 + $0x5c] sm:$0xf]
    %v410 = vld [vmem:[%s3 + $0x60] sm:$0xf]
    %v411 = vld [vmem:[%s3 + $0x64] sm:$0xf]
    %v412 = vld [vmem:[%s3 + $0x68] sm:$0xf]
    %v413 = vld [vmem:[%s3 + $0x6c] sm:$0xf]
    %v414 = vld [vmem:[%s3 + $0x70] sm:$0xf]
    %v415 = vld [vmem:[%s3 + $0x74] sm:$0xf]
    %v416 = vld [vmem:[%s3 + $0x78] sm:$0xf]
    %v417 = vld [vmem:[%s3 + $0x7c] sm:$0xf]
    %v418 = vld [vmem:[%s3 + $0x80] sm:$0xf]
    %v419 = vld [vmem:[%s3 + $0x84] sm:$0xf]
    %v420 = vld [vmem:[%s3 + $0x88] sm:$0xf]
    %v421 = vld [vmem:[%s3 + $0x8c] sm:$0xf]
    %v422 = vld [vmem:[%s3 + $0x90] sm:$0xf]
    %v423 = vld [vmem:[%s3 + $0x94] sm:$0xf]
    %v424 = vld [vmem:[%s3 + $0x98] sm:$0xf]
    %v425 = vld [vmem:[%s3 + $0x9c] sm:$0xf]
    %v426 = vld [vmem:[%s3 + $0xa0] sm:$0xf]
    %v427 = vld [vmem:[%s3 + $0xa4] sm:$0xf]
    %v428 = vld [vmem:[%s3 + $0xa8] sm:$0xf]
    %v429 = vld [vmem:[%s3 + $0xac] sm:$0xf]
    %v430 = vld [vmem:[%s3 + $0xb0] sm:$0xf]
    %v431 = vld [vmem:[%s3 + $0xb4] sm:$0xf]
    %v432 = vld [vmem:[%s3 + $0xb8] sm:$0xf]
    %v433 = vld [vmem:[%s3 + $0xbc] sm:$0xf]
    %v434 = vld [vmem:[%s3 + $0xc0] sm:$0xf]
    %v435 = vld [vmem:[%s3 + $0xc4] sm:$0xf]
    %v436 = vld [vmem:[%s3 + $0xc8] sm:$0xf]
    %v437 = vld [vmem:[%s3 + $0xcc] sm:$0xf]
    %v438 = vld [vmem:[%s3 + $0xd0] sm:$0xf]
    %v439 = vld [vmem:[%s3 + $0xd4] sm:$0xf]
    %v440 = vld [vmem:[%s3 + $0xd8] sm:$0xf]
    %v441 = vld [vmem:[%s3 + $0xdc] sm:$0xf]
    %v442 = vld [vmem:[%s3 + $0xe0] sm:$0xf]
    %v443 = vld [vmem:[%s3 + $0xe4] sm:$0xf]
    %v444 = vld [vmem:[%s3 + $0xe8] sm:$0xf]
    %v445 = vld [vmem:[%s3 + $0xec] sm:$0xf]
    %v446 = vld [vmem:[%s3 + $0xf0] sm:$0xf]
    %v447 = vld [vmem:[%s3 + $0xf4] sm:$0xf]
    %v448 = vld [vmem:[%s3 + $0xf8] sm:$0xf]
    %v449 = vld [vmem:[%s3 + $0xfc] sm:$0xf]
    %v450 = vld [vmem:[%s3 + $0x100] sm:$0xf]
    %v451 = vld [vmem:[%s3 + $0x104] sm:$0xf]
    %v452 = vld [vmem:[%s3 + $0x108] sm:$0xf]
    %v453 = vld [vmem:[%s3 + $0x10c] sm:$0xf]
    %v454 = vld [vmem:[%s3 + $0x110] sm:$0xf]
    %v455 = vld [vmem:[%s3 + $0x114] sm:$0xf]
    %v456 = vld [vmem:[%s3 + $0x118] sm:$0xf]
    %v457 = vld [vmem:[%s3 + $0x11c] sm:$0xf]
    %v458 = vld [vmem:[%s3 + $0x120] sm:$0xf]
    %v459 = vld [vmem:[%s3 + $0x124] sm:$0xf]
    %v460 = vld [vmem:[%s3 + $0x128] sm:$0xf]
    %v461 = vld [vmem:[%s3 + $0x12c] sm:$0xf]
    %v462 = vld [vmem:[%s3 + $0x130] sm:$0xf]
    %v463 = vld [vmem:[%s3 + $0x134] sm:$0xf]
    %v464 = vld [vmem:[%s3 + $0x138] sm:$0xf]
    %v465 = vld [vmem:[%s3 + $0x13c] sm:$0xf]
    %v466 = vld [vmem:[%s3 + $0x140] sm:$0xf]
    %v467 = vld [vmem:[%s3 + $0x144] sm:$0xf]
    %v468 = vld [vmem:[%s3 + $0x148] sm:$0xf]
    %v469 = vld [vmem:[%s3 + $0x14c] sm:$0xf]
    %v470 = vld [vmem:[%s3 + $0x150] sm:$0xf]
    %v471 = vld [vmem:[%s3 + $0x154] sm:$0xf]
    %v472 = vld [vmem:[%s3 + $0x158] sm:$0xf]
    %v473 = vld [vmem:[%s3 + $0x15c] sm:$0xf]
    %v474 = vld [vmem:[%s3 + $0x160] sm:$0xf]
    %v475 = vld [vmem:[%s3 + $0x164] sm:$0xf]
    %v476 = vld [vmem:[%s3 + $0x168] sm:$0xf]
    %v477 = vld [vmem:[%s3 + $0x16c] sm:$0xf]
    %v478 = vld [vmem:[%s3 + $0x170] sm:$0xf]
    %v479 = vld [vmem:[%s3 + $0x174] sm:$0xf]
    %v480 = vld [vmem:[%s3 + $0x178] sm:$0xf]
    %v481 = vld [vmem:[%s3 + $0x17c] sm:$0xf]
    %v578 = vunpack.c.l.b16 %v386
    %v579 = vunpack.c.l.b16 %v387
    %v580 = vunpack.c.l.b16 %v388
    %v581 = vunpack.c.l.b16 %v389
    %v582 = vunpack.c.l.b16 %v390
    %v583 = vunpack.c.l.b16 %v391
    %v584 = vunpack.c.l.b16 %v392
    %v585 = vunpack.c.l.b16 %v393
    %v586 = vunpack.c.l.b16 %v394
    %v587 = vunpack.c.l.b16 %v395
    %v588 = vunpack.c.l.b16 %v396
    %v589 = vunpack.c.l.b16 %v397
    %v590 = vunpack.c.l.b16 %v398
    %v591 = vunpack.c.l.b16 %v399
    %v592 = vunpack.c.l.b16 %v400
    %v593 = vunpack.c.l.b16 %v401
    %v594 = vunpack.c.l.b16 %v402
    %v595 = vunpack.c.l.b16 %v403
    %v596 = vunpack.c.l.b16 %v404
    %v597 = vunpack.c.l.b16 %v405
    %v598 = vunpack.c.l.b16 %v406
    %v599 = vunpack.c.l.b16 %v407
    %v600 = vunpack.c.l.b16 %v408
    %v601 = vunpack.c.l.b16 %v409
    %v602 = vunpack.c.l.b16 %v410
    %v603 = vunpack.c.l.b16 %v411
    %v604 = vunpack.c.l.b16 %v412
    %v605 = vunpack.c.l.b16 %v413
    %v606 = vunpack.c.l.b16 %v414
    %v607 = vunpack.c.l.b16 %v415
    %v608 = vunpack.c.l.b16 %v416
    %v609 = vunpack.c.l.b16 %v417
    %v610 = vunpack.c.l.b16 %v418
    %v611 = vunpack.c.l.b16 %v419
    %v612 = vunpack.c.l.b16 %v420
    %v613 = vunpack.c.l.b16 %v421
    %v614 = vunpack.c.l.b16 %v422
    %v615 = vunpack.c.l.b16 %v423
    %v616 = vunpack.c.l.b16 %v424
    %v617 = vunpack.c.l.b16 %v425
    %v618 = vunpack.c.l.b16 %v426
    %v619 = vunpack.c.l.b16 %v427
    %v620 = vunpack.c.l.b16 %v428
    %v621 = vunpack.c.l.b16 %v429
    %v622 = vunpack.c.l.b16 %v430
    %v623 = vunpack.c.l.b16 %v431
    %v624 = vunpack.c.l.b16 %v432
    %v625 = vunpack.c.l.b16 %v433
    %v626 = vunpack.c.l.b16 %v434
    %v627 = vunpack.c.l.b16 %v435
    %v628 = vunpack.c.l.b16 %v436
    %v629 = vunpack.c.l.b16 %v437
    %v630 = vunpack.c.l.b16 %v438
    %v631 = vunpack.c.l.b16 %v439
    %v632 = vunpack.c.l.b16 %v440
    %v633 = vunpack.c.l.b16 %v441
    %v634 = vunpack.c.l.b16 %v442
    %v635 = vunpack.c.l.b16 %v443
    %v636 = vunpack.c.l.b16 %v444
    %v637 = vunpack.c.l.b16 %v445
    %v638 = vunpack.c.l.b16 %v446
    %v639 = vunpack.c.l.b16 %v447
    %v640 = vunpack.c.l.b16 %v448
    %v641 = vunpack.c.l.b16 %v449
    %v642 = vunpack.c.l.b16 %v450
    %v643 = vunpack.c.l.b16 %v451
    %v644 = vunpack.c.l.b16 %v452
    %v645 = vunpack.c.l.b16 %v453
    %v646 = vunpack.c.l.b16 %v454
    %v647 = vunpack.c.l.b16 %v455
    %v648 = vunpack.c.l.b16 %v456
    %v649 = vunpack.c.l.b16 %v457
    %v650 = vunpack.c.l.b16 %v458
    %v651 = vunpack.c.l.b16 %v459
    %v652 = vunpack.c.l.b16 %v460
    %v653 = vunpack.c.l.b16 %v461
    %v654 = vunpack.c.l.b16 %v462
    %v655 = vunpack.c.l.b16 %v463
    %v656 = vunpack.c.l.b16 %v464
    %v657 = vunpack.c.l.b16 %v465
    %v658 = vunpack.c.l.b16 %v466
    %v659 = vunpack.c.l.b16 %v467
    %v660 = vunpack.c.l.b16 %v468
    %v661 = vunpack.c.l.b16 %v469
    %v662 = vunpack.c.l.b16 %v470
    %v663 = vunpack.c.l.b16 %v471
    %v664 = vunpack.c.l.b16 %v472
    %v665 = vunpack.c.l.b16 %v473
    %v666 = vunpack.c.l.b16 %v474
    %v667 = vunpack.c.l.b16 %v475
    %v668 = vunpack.c.l.b16 %v476
    %v669 = vunpack.c.l.b16 %v477
    %v670 = vunpack.c.l.b16 %v478
    %v671 = vunpack.c.l.b16 %v479
    %v672 = vunpack.c.l.b16 %v480
    %v673 = vunpack.c.l.b16 %v481
    %v674 = vpack.c.b16 %v579, %v578
    %v675 = vpack.c.b16 %v581, %v580
    %v676 = vpack.c.b16 %v583, %v582
    %v677 = vpack.c.b16 %v585, %v584
    %v678 = vpack.c.b16 %v587, %v586
    %v679 = vpack.c.b16 %v589, %v588
    %v680 = vpack.c.b16 %v591, %v590
    %v681 = vpack.c.b16 %v593, %v592
    %v682 = vpack.c.b16 %v595, %v594
    %v683 = vpack.c.b16 %v597, %v596
    %v684 = vpack.c.b16 %v599, %v598
    %v685 = vpack.c.b16 %v601, %v600
    %v686 = vpack.c.b16 %v603, %v602
    %v687 = vpack.c.b16 %v605, %v604
    %v688 = vpack.c.b16 %v607, %v606
    %v689 = vpack.c.b16 %v609, %v608
    %v690 = vpack.c.b16 %v611, %v610
    %v691 = vpack.c.b16 %v613, %v612
    %v692 = vpack.c.b16 %v615, %v614
    %v693 = vpack.c.b16 %v617, %v616
    %v694 = vpack.c.b16 %v619, %v618
    %v695 = vpack.c.b16 %v621, %v620
    %v696 = vpack.c.b16 %v623, %v622
    %v697 = vpack.c.b16 %v625, %v624
    %v698 = vpack.c.b16 %v627, %v626
    %v699 = vpack.c.b16 %v629, %v628
    %v700 = vpack.c.b16 %v631, %v630
    %v701 = vpack.c.b16 %v633, %v632
    %v702 = vpack.c.b16 %v635, %v634
    %v703 = vpack.c.b16 %v637, %v636
    %v704 = vpack.c.b16 %v639, %v638
    %v705 = vpack.c.b16 %v641, %v640
    %v706 = vpack.c.b16 %v643, %v642
    %v707 = vpack.c.b16 %v645, %v644
    %v708 = vpack.c.b16 %v647, %v646
    %v709 = vpack.c.b16 %v649, %v648
    %v710 = vpack.c.b16 %v651, %v650
    %v711 = vpack.c.b16 %v653, %v652
    %v712 = vpack.c.b16 %v655, %v654
    %v713 = vpack.c.b16 %v657, %v656
    %v714 = vpack.c.b16 %v659, %v658
    %v715 = vpack.c.b16 %v661, %v660
    %v716 = vpack.c.b16 %v663, %v662
    %v717 = vpack.c.b16 %v665, %v664
    %v718 = vpack.c.b16 %v667, %v666
    %v719 = vpack.c.b16 %v669, %v668
    %v720 = vpack.c.b16 %v671, %v670
    %v721 = vpack.c.b16 %v673, %v672
    %770 = vmatprep.subr.bf16.mxu0 0
    %771 = vmatpush1.bf16.msra.mxu0 %v681
    %772 = vmatprep.subr.bf16.mxu0 0
    %773 = vmatpush1.bf16.msra.mxu0 %v680
    %774 = vmatprep.subr.bf16.mxu0 0
    %775 = vmatpush1.bf16.msra.mxu0 %v679
    %776 = vmatprep.subr.bf16.mxu0 0
    %777 = vmatpush1.bf16.msra.mxu0 %v678
    %778 = vmatprep.subr.bf16.mxu0 0
    %779 = vmatpush1.bf16.msra.mxu0 %v677
    %780 = vmatprep.subr.bf16.mxu0 0
    %781 = vmatpush1.bf16.msra.mxu0 %v676
    %782 = vmatprep.subr.bf16.mxu0 0
    %783 = vmatpush1.bf16.msra.mxu0 %v675
    %784 = vmatprep.subr.bf16.mxu0 0
    %785 = vmatpush1.bf16.msra.mxu0 %v674
    %786 = vmatprep.subr.bf16.mxu0 0
    %787 = vmatpush2.bf16.msra.mxu0 %v689
    %788 = vmatprep.subr.bf16.mxu0 0
    %789 = vmatpush2.bf16.msra.mxu0 %v688
    %790 = vmatprep.subr.bf16.mxu0 0
    %791 = vmatpush2.bf16.msra.mxu0 %v687
    %792 = vmatprep.subr.bf16.mxu0 0
    %793 = vmatpush2.bf16.msra.mxu0 %v686
    %794 = vmatprep.subr.bf16.mxu0 0
    %795 = vmatpush2.bf16.msra.mxu0 %v685
    %796 = vmatprep.subr.bf16.mxu0 0
    %797 = vmatpush2.bf16.msra.mxu0 %v684
    %798 = vmatprep.subr.bf16.mxu0 0
    %799 = vmatpush2.bf16.msra.mxu0 %v683
    %800 = vmatprep.subr.bf16.mxu0 0
    %801 = vmatpush2.bf16.msra.mxu0 %v682
    %802 = vmatprep.mubr.bf16.mxu0 %v147
    %803 = vmatmul.mubr.bf16.gmra.mxu0 %v146
    %v804 = vpop.f32.mrf.mxu0
    %v805 = vadd.f32 0.0, %v804
    %v806 = vpop.f32.mrf.mxu0
    %v807 = vpop.f32.mrf.mxu0
    %v808 = vadd.f32 0.0, %v807
    %v809 = vpop.f32.mrf.mxu0
    %810 = vmatprep.mubr.bf16.mxu0 %v153
    %811 = vmatmul.mubr.bf16.gmra.mxu0 %v152
    %v812 = vpop.f32.mrf.mxu0
    %v813 = vadd.f32 0.0, %v812
    %v814 = vpop.f32.mrf.mxu0
    %v815 = vpop.f32.mrf.mxu0
    %v816 = vadd.f32 0.0, %v815
    %v817 = vpop.f32.mrf.mxu0
    %818 = vmatprep.mubr.bf16.mxu0 %v159
    %819 = vmatmul.mubr.bf16.gmra.mxu0 %v158
    %v820 = vpop.f32.mrf.mxu0
    %v821 = vadd.f32 0.0, %v820
    %v822 = vpop.f32.mrf.mxu0
    %v823 = vpop.f32.mrf.mxu0
    %v824 = vadd.f32 0.0, %v823
    %v825 = vpop.f32.mrf.mxu0
    %826 = vmatprep.mubr.bf16.mxu0 %v165
    %827 = vmatmul.mubr.bf16.gmra.mxu0 %v164
    %v828 = vpop.f32.mrf.mxu0
    %v829 = vadd.f32 0.0, %v828
    %v830 = vpop.f32.mrf.mxu0
    %v831 = vpop.f32.mrf.mxu0
    %v832 = vadd.f32 0.0, %v831
    %v833 = vpop.f32.mrf.mxu0
    %834 = vmatprep.mubr.bf16.mxu0 %v171
    %835 = vmatmul.mubr.bf16.gmra.mxu0 %v170
    %v836 = vpop.f32.mrf.mxu0
    %v837 = vadd.f32 0.0, %v836
    %v838 = vpop.f32.mrf.mxu0
    %v839 = vpop.f32.mrf.mxu0
    %v840 = vadd.f32 0.0, %v839
    %v841 = vpop.f32.mrf.mxu0
    %842 = vmatprep.mubr.bf16.mxu0 %v177
    %843 = vmatmul.mubr.bf16.gmra.mxu0 %v176
    %v844 = vpop.f32.mrf.mxu0
    %v845 = vadd.f32 0.0, %v844
    %v846 = vpop.f32.mrf.mxu0
    %v847 = vpop.f32.mrf.mxu0
    %v848 = vadd.f32 0.0, %v847
    %v849 = vpop.f32.mrf.mxu0
    %850 = vmatprep.mubr.bf16.mxu0 %v183
    %851 = vmatmul.mubr.bf16.gmra.mxu0 %v182
    %v852 = vpop.f32.mrf.mxu0
    %v853 = vadd.f32 0.0, %v852
    %v854 = vpop.f32.mrf.mxu0
    %v855 = vpop.f32.mrf.mxu0
    %v856 = vadd.f32 0.0, %v855
    %v857 = vpop.f32.mrf.mxu0
    %858 = vmatprep.mubr.bf16.mxu0 %v189
    %859 = vmatmul.mubr.bf16.gmra.mxu0 %v188
    %v860 = vpop.f32.mrf.mxu0
    %v861 = vadd.f32 0.0, %v860
    %v862 = vpop.f32.mrf.mxu0
    %v863 = vpop.f32.mrf.mxu0
    %v864 = vadd.f32 0.0, %v863
    %v865 = vpop.f32.mrf.mxu0
    %866 = vdwg.mxu0
    %867 = vmatprep.subr.bf16.mxu0 0
    %868 = vmatpush1.bf16.msra.mxu0 %v697
    %869 = vmatprep.subr.bf16.mxu0 0
    %870 = vmatpush1.bf16.msra.mxu0 %v696
    %871 = vmatprep.subr.bf16.mxu0 0
    %872 = vmatpush1.bf16.msra.mxu0 %v695
    %873 = vmatprep.subr.bf16.mxu0 0
    %874 = vmatpush1.bf16.msra.mxu0 %v694
    %875 = vmatprep.subr.bf16.mxu0 0
    %876 = vmatpush1.bf16.msra.mxu0 %v693
    %877 = vmatprep.subr.bf16.mxu0 0
    %878 = vmatpush1.bf16.msra.mxu0 %v692
    %879 = vmatprep.subr.bf16.mxu0 0
    %880 = vmatpush1.bf16.msra.mxu0 %v691
    %881 = vmatprep.subr.bf16.mxu0 0
    %882 = vmatpush1.bf16.msra.mxu0 %v690
    %883 = vmatprep.subr.bf16.mxu0 0
    %884 = vmatpush2.bf16.msra.mxu0 %v705
    %885 = vmatprep.subr.bf16.mxu0 0
    %886 = vmatpush2.bf16.msra.mxu0 %v704
    %887 = vmatprep.subr.bf16.mxu0 0
    %888 = vmatpush2.bf16.msra.mxu0 %v703
    %889 = vmatprep.subr.bf16.mxu0 0
    %890 = vmatpush2.bf16.msra.mxu0 %v702
    %891 = vmatprep.subr.bf16.mxu0 0
    %892 = vmatpush2.bf16.msra.mxu0 %v701
    %893 = vmatprep.subr.bf16.mxu0 0
    %894 = vmatpush2.bf16.msra.mxu0 %v700
    %895 = vmatprep.subr.bf16.mxu0 0
    %896 = vmatpush2.bf16.msra.mxu0 %v699
    %897 = vmatprep.subr.bf16.mxu0 0
    %898 = vmatpush2.bf16.msra.mxu0 %v698
    %899 = vmatprep.mubr.bf16.mxu0 %v149
    %900 = vmatmul.mubr.bf16.gmra.mxu0 %v148
    %v901 = vpop.f32.mrf.mxu0
    %v902 = vadd.f32 %v805, %v901
    %v903 = vpop.f32.mrf.mxu0
    %v904 = vpop.f32.mrf.mxu0
    %v905 = vadd.f32 %v808, %v904
    %v906 = vpop.f32.mrf.mxu0
    %907 = vmatprep.mubr.bf16.mxu0 %v155
    %908 = vmatmul.mubr.bf16.gmra.mxu0 %v154
    %v909 = vpop.f32.mrf.mxu0
    %v910 = vadd.f32 %v813, %v909
    %v911 = vpop.f32.mrf.mxu0
    %v912 = vpop.f32.mrf.mxu0
    %v913 = vadd.f32 %v816, %v912
    %v914 = vpop.f32.mrf.mxu0
    %915 = vmatprep.mubr.bf16.mxu0 %v161
    %916 = vmatmul.mubr.bf16.gmra.mxu0 %v160
    %v917 = vpop.f32.mrf.mxu0
    %v918 = vadd.f32 %v821, %v917
    %v919 = vpop.f32.mrf.mxu0
    %v920 = vpop.f32.mrf.mxu0
    %v921 = vadd.f32 %v824, %v920
    %v922 = vpop.f32.mrf.mxu0
    %923 = vmatprep.mubr.bf16.mxu0 %v167
    %924 = vmatmul.mubr.bf16.gmra.mxu0 %v166
    %v925 = vpop.f32.mrf.mxu0
    %v926 = vadd.f32 %v829, %v925
    %v927 = vpop.f32.mrf.mxu0
    %v928 = vpop.f32.mrf.mxu0
    %v929 = vadd.f32 %v832, %v928
    %v930 = vpop.f32.mrf.mxu0
    %931 = vmatprep.mubr.bf16.mxu0 %v173
    %932 = vmatmul.mubr.bf16.gmra.mxu0 %v172
    %v933 = vpop.f32.mrf.mxu0
    %v934 = vadd.f32 %v837, %v933
    %v935 = vpop.f32.mrf.mxu0
    %v936 = vpop.f32.mrf.mxu0
    %v937 = vadd.f32 %v840, %v936
    %v938 = vpop.f32.mrf.mxu0
    %939 = vmatprep.mubr.bf16.mxu0 %v179
    %940 = vmatmul.mubr.bf16.gmra.mxu0 %v178
    %v941 = vpop.f32.mrf.mxu0
    %v942 = vadd.f32 %v845, %v941
    %v943 = vpop.f32.mrf.mxu0
    %v944 = vpop.f32.mrf.mxu0
    %v945 = vadd.f32 %v848, %v944
    %v946 = vpop.f32.mrf.mxu0
    %947 = vmatprep.mubr.bf16.mxu0 %v185
    %948 = vmatmul.mubr.bf16.gmra.mxu0 %v184
    %v949 = vpop.f32.mrf.mxu0
    %v950 = vadd.f32 %v853, %v949
    %v951 = vpop.f32.mrf.mxu0
    %v952 = vpop.f32.mrf.mxu0
    %v953 = vadd.f32 %v856, %v952
    %v954 = vpop.f32.mrf.mxu0
    %955 = vmatprep.mubr.bf16.mxu0 %v191
    %956 = vmatmul.mubr.bf16.gmra.mxu0 %v190
    %v957 = vpop.f32.mrf.mxu0
    %v958 = vadd.f32 %v861, %v957
    %v959 = vpop.f32.mrf.mxu0
    %v960 = vpop.f32.mrf.mxu0
    %v961 = vadd.f32 %v864, %v960
    %v962 = vpop.f32.mrf.mxu0
    %963 = vdwg.mxu0
    %964 = vmatprep.subr.bf16.mxu0 0
    %965 = vmatpush1.bf16.msra.mxu0 %v713
    %966 = vmatprep.subr.bf16.mxu0 0
    %967 = vmatpush1.bf16.msra.mxu0 %v712
    %968 = vmatprep.subr.bf16.mxu0 0
    %969 = vmatpush1.bf16.msra.mxu0 %v711
    %970 = vmatprep.subr.bf16.mxu0 0
    %971 = vmatpush1.bf16.msra.mxu0 %v710
    %972 = vmatprep.subr.bf16.mxu0 0
    %973 = vmatpush1.bf16.msra.mxu0 %v709
    %974 = vmatprep.subr.bf16.mxu0 0
    %975 = vmatpush1.bf16.msra.mxu0 %v708
    %976 = vmatprep.subr.bf16.mxu0 0
    %977 = vmatpush1.bf16.msra.mxu0 %v707
    %978 = vmatprep.subr.bf16.mxu0 0
    %979 = vmatpush1.bf16.msra.mxu0 %v706
    %980 = vmatprep.subr.bf16.mxu0 0
    %981 = vmatpush2.bf16.msra.mxu0 %v721
    %982 = vmatprep.subr.bf16.mxu0 0
    %983 = vmatpush2.bf16.msra.mxu0 %v720
    %984 = vmatprep.subr.bf16.mxu0 0
    %985 = vmatpush2.bf16.msra.mxu0 %v719
    %986 = vmatprep.subr.bf16.mxu0 0
    %987 = vmatpush2.bf16.msra.mxu0 %v718
    %988 = vmatprep.subr.bf16.mxu0 0
    %989 = vmatpush2.bf16.msra.mxu0 %v717
    %990 = vmatprep.subr.bf16.mxu0 0
    %991 = vmatpush2.bf16.msra.mxu0 %v716
    %992 = vmatprep.subr.bf16.mxu0 0
    %993 = vmatpush2.bf16.msra.mxu0 %v715
    %994 = vmatprep.subr.bf16.mxu0 0
    %995 = vmatpush2.bf16.msra.mxu0 %v714
    %996 = vmatprep.mubr.bf16.mxu0 %v151
    %997 = vmatmul.mubr.bf16.gmra.mxu0 %v150
    %v998 = vpop.f32.mrf.mxu0
    %v999 = vadd.f32 %v902, %v998
    %v1000 = vpop.f32.mrf.mxu0
    %v1001 = vpop.f32.mrf.mxu0
    %v1002 = vadd.f32 %v905, %v1001
    %v1003 = vpop.f32.mrf.mxu0
    %1004 = vmatprep.mubr.bf16.mxu0 %v157
    %1005 = vmatmul.mubr.bf16.gmra.mxu0 %v156
    %v1006 = vpop.f32.mrf.mxu0
    %v1007 = vadd.f32 %v910, %v1006
    %v1008 = vpop.f32.mrf.mxu0
    %v1009 = vpop.f32.mrf.mxu0
    %v1010 = vadd.f32 %v913, %v1009
    %v1011 = vpop.f32.mrf.mxu0
    %1012 = vmatprep.mubr.bf16.mxu0 %v163
    %1013 = vmatmul.mubr.bf16.gmra.mxu0 %v162
    %v1014 = vpop.f32.mrf.mxu0
    %v1015 = vadd.f32 %v918, %v1014
    %v1016 = vpop.f32.mrf.mxu0
    %v1017 = vpop.f32.mrf.mxu0
    %v1018 = vadd.f32 %v921, %v1017
    %v1019 = vpop.f32.mrf.mxu0
    %1020 = vmatprep.mubr.bf16.mxu0 %v169
    %1021 = vmatmul.mubr.bf16.gmra.mxu0 %v168
    %v1022 = vpop.f32.mrf.mxu0
    %v1023 = vadd.f32 %v926, %v1022
    %v1024 = vpop.f32.mrf.mxu0
    %v1025 = vpop.f32.mrf.mxu0
    %v1026 = vadd.f32 %v929, %v1025
    %v1027 = vpop.f32.mrf.mxu0
    %1028 = vmatprep.mubr.bf16.mxu0 %v175
    %1029 = vmatmul.mubr.bf16.gmra.mxu0 %v174
    %v1030 = vpop.f32.mrf.mxu0
    %v1031 = vadd.f32 %v934, %v1030
    %v1032 = vpop.f32.mrf.mxu0
    %v1033 = vpop.f32.mrf.mxu0
    %v1034 = vadd.f32 %v937, %v1033
    %v1035 = vpop.f32.mrf.mxu0
    %1036 = vmatprep.mubr.bf16.mxu0 %v181
    %1037 = vmatmul.mubr.bf16.gmra.mxu0 %v180
    %v1038 = vpop.f32.mrf.mxu0
    %v1039 = vadd.f32 %v942, %v1038
    %v1040 = vpop.f32.mrf.mxu0
    %v1041 = vpop.f32.mrf.mxu0
    %v1042 = vadd.f32 %v945, %v1041
    %v1043 = vpop.f32.mrf.mxu0
    %1044 = vmatprep.mubr.bf16.mxu0 %v187
    %1045 = vmatmul.mubr.bf16.gmra.mxu0 %v186
    %v1046 = vpop.f32.mrf.mxu0
    %v1047 = vadd.f32 %v950, %v1046
    %v1048 = vpop.f32.mrf.mxu0
    %v1049 = vpop.f32.mrf.mxu0
    %v1050 = vadd.f32 %v953, %v1049
    %v1051 = vpop.f32.mrf.mxu0
    %1052 = vmatprep.mubr.bf16.mxu0 %v193
    %1053 = vmatmul.mubr.bf16.gmra.mxu0 %v192
    %v1054 = vpop.f32.mrf.mxu0
    %v1055 = vadd.f32 %v958, %v1054
    %v1056 = vpop.f32.mrf.mxu0
    %v1057 = vpop.f32.mrf.mxu0
    %v1058 = vadd.f32 %v961, %v1057
    %v1059 = vpop.f32.mrf.mxu0
    %1060 = vdwg.mxu0
    %v1061 = vld [vmem:[%s4] sm:$0xff]
    %v1062 = vld [vmem:[%s4 + $0x8] sm:$0xff]
    %v1063 = vld [vmem:[%s4 + $0x10] sm:$0xff]
    %v1064 = vld [vmem:[%s4 + $0x18] sm:$0xff]
    %vm1065 = vcmask 64512
    %v1067 = vsel %vm1065, %v999, 0
    %v1070 = vsel %vm1065, %v1002, 0
    %v1073 = vsel %vm1065, %v1007, 0
    %v1076 = vsel %vm1065, %v1010, 0
    %v1079 = vsel %vm1065, %v1015, 0
    %v1082 = vsel %vm1065, %v1018, 0
    %v1085 = vsel %vm1065, %v1023, 0
    %v1088 = vsel %vm1065, %v1026, 0
    %v1091 = vsel %vm1065, %v1031, 0
    %v1094 = vsel %vm1065, %v1034, 0
    %v1097 = vsel %vm1065, %v1039, 0
    %v1100 = vsel %vm1065, %v1042, 0
    %v1103 = vsel %vm1065, %v1047, 0
    %v1106 = vsel %vm1065, %v1050, 0
    %v1109 = vsel %vm1065, %v1055, 0
    %v1112 = vsel %vm1065, %v1058, 0
    %1114 = vmatprep.subr.mxu0 0.0
    %1115 = vmatpush1.msra.mxu0 0.0
    %1116 = vmatprep.subr.mxu0 0.0
    %1117 = vmatpush1.msra.mxu0 0.0
    %1118 = vmatprep.subr.mxu0 0.0
    %1119 = vmatpush1.msra.mxu0 0.0
    %1120 = vmatprep.subr.mxu0 0.0
    %1121 = vmatpush1.msra.mxu0 0.0
    %1122 = vmatprep.subr.mxu0 0.0
    %1123 = vmatpush1.msra.mxu0 0.0
    %1124 = vmatprep.subr.mxu0 0.0
    %1125 = vmatpush1.msra.mxu0 0.0
    %1126 = vmatprep.subr.mxu0 0.0
    %1127 = vmatpush1.msra.mxu0 0.0
    %1128 = vmatprep.subr.mxu0 0.0
    %1129 = vmatpush1.msra.mxu0 0.0
    %1130 = vmatprep.subr.mxu0 0.0
    %1131 = vmatpush1.msra.mxu0 0.0
    %1132 = vmatprep.subr.mxu0 0.0
    %1133 = vmatpush1.msra.mxu0 0.0
    %1134 = vmatprep.subr.mxu0 0.0
    %1135 = vmatpush1.msra.mxu0 0.0
    %1136 = vmatprep.subr.mxu0 0.0
    %1137 = vmatpush1.msra.mxu0 0.0
    %1138 = vmatprep.subr.mxu0 0.0
    %1139 = vmatpush1.msra.mxu0 0.0
    %1140 = vmatprep.subr.mxu0 0.0
    %1141 = vmatpush1.msra.mxu0 0.0
    %1142 = vmatprep.subr.mxu0 0.0
    %1143 = vmatpush1.msra.mxu0 0.0
    %1144 = vmatprep.subr.mxu0 %v1062
    %1145 = vmatpush1.msra.mxu0 %v1061
    %1146 = vmatprep.subr.mxu0 0.0
    %1147 = vmatpush2.msra.mxu0 0.0
    %1148 = vmatprep.subr.mxu0 0.0
    %1149 = vmatpush2.msra.mxu0 0.0
    %1150 = vmatprep.subr.mxu0 0.0
    %1151 = vmatpush2.msra.mxu0 0.0
    %1152 = vmatprep.subr.mxu0 0.0
    %1153 = vmatpush2.msra.mxu0 0.0
    %1154 = vmatprep.subr.mxu0 0.0
    %1155 = vmatpush2.msra.mxu0 0.0
    %1156 = vmatprep.subr.mxu0 0.0
    %1157 = vmatpush2.msra.mxu0 0.0
    %1158 = vmatprep.subr.mxu0 0.0
    %1159 = vmatpush2.msra.mxu0 0.0
    %1160 = vmatprep.subr.mxu0 0.0
    %1161 = vmatpush2.msra.mxu0 0.0
    %1162 = vmatprep.subr.mxu0 0.0
    %1163 = vmatpush2.msra.mxu0 0.0
    %1164 = vmatprep.subr.mxu0 0.0
    %1165 = vmatpush2.msra.mxu0 0.0
    %1166 = vmatprep.subr.mxu0 0.0
    %1167 = vmatpush2.msra.mxu0 0.0
    %1168 = vmatprep.subr.mxu0 0.0
    %1169 = vmatpush2.msra.mxu0 0.0
    %1170 = vmatprep.subr.mxu0 0.0
    %1171 = vmatpush2.msra.mxu0 0.0
    %1172 = vmatprep.subr.mxu0 0.0
    %1173 = vmatpush2.msra.mxu0 0.0
    %1174 = vmatprep.subr.mxu0 0.0
    %1175 = vmatpush2.msra.mxu0 0.0
    %1176 = vmatprep.subr.mxu0 0.0
    %1177 = vmatpush2.msra.mxu0 0.0
    %1178 = vmatprep.mubr.f32.mxu0 0.0
    %1179 = vmatmul.mubr.f32.gmra.mxu0 %v1067
    %v1180 = vpop.f32.mrf.mxu0
    %v1181 = vadd.f32 0.0, %v1180
    %v1182 = vpop.f32.mrf.mxu0
    %v1183 = vadd.f32 0.0, %v1182
    %1184 = vmatprep.mubr.f32.mxu0 0.0
    %1185 = vmatmul.mubr.f32.gmra.mxu0 %v1070
    %v1186 = vpop.f32.mrf.mxu0
    %v1187 = vadd.f32 0.0, %v1186
    %v1188 = vpop.f32.mrf.mxu0
    %v1189 = vadd.f32 0.0, %v1188
    %1190 = vmatprep.mubr.f32.mxu0 0.0
    %1191 = vmatmul.mubr.f32.gmra.mxu0 %v1073
    %v1192 = vpop.f32.mrf.mxu0
    %v1193 = vadd.f32 0.0, %v1192
    %v1194 = vpop.f32.mrf.mxu0
    %v1195 = vadd.f32 0.0, %v1194
    %1196 = vmatprep.mubr.f32.mxu0 0.0
    %1197 = vmatmul.mubr.f32.gmra.mxu0 %v1076
    %v1198 = vpop.f32.mrf.mxu0
    %v1199 = vadd.f32 0.0, %v1198
    %v1200 = vpop.f32.mrf.mxu0
    %v1201 = vadd.f32 0.0, %v1200
    %1202 = vmatprep.mubr.f32.mxu0 0.0
    %1203 = vmatmul.mubr.f32.gmra.mxu0 %v1079
    %v1204 = vpop.f32.mrf.mxu0
    %v1205 = vadd.f32 0.0, %v1204
    %v1206 = vpop.f32.mrf.mxu0
    %v1207 = vadd.f32 0.0, %v1206
    %1208 = vmatprep.mubr.f32.mxu0 0.0
    %1209 = vmatmul.mubr.f32.gmra.mxu0 %v1082
    %v1210 = vpop.f32.mrf.mxu0
    %v1211 = vadd.f32 0.0, %v1210
    %v1212 = vpop.f32.mrf.mxu0
    %v1213 = vadd.f32 0.0, %v1212
    %1214 = vmatprep.mubr.f32.mxu0 0.0
    %1215 = vmatmul.mubr.f32.gmra.mxu0 %v1085
    %v1216 = vpop.f32.mrf.mxu0
    %v1217 = vadd.f32 0.0, %v1216
    %v1218 = vpop.f32.mrf.mxu0
    %v1219 = vadd.f32 0.0, %v1218
    %1220 = vmatprep.mubr.f32.mxu0 0.0
    %1221 = vmatmul.mubr.f32.gmra.mxu0 %v1088
    %v1222 = vpop.f32.mrf.mxu0
    %v1223 = vadd.f32 0.0, %v1222
    %v1224 = vpop.f32.mrf.mxu0
    %v1225 = vadd.f32 0.0, %v1224
    %1226 = vmatprep.mubr.f32.mxu0 0.0
    %1227 = vmatmul.mubr.f32.gmra.mxu0 %v1091
    %v1228 = vpop.f32.mrf.mxu0
    %v1229 = vadd.f32 0.0, %v1228
    %v1230 = vpop.f32.mrf.mxu0
    %v1231 = vadd.f32 0.0, %v1230
    %1232 = vmatprep.mubr.f32.mxu0 0.0
    %1233 = vmatmul.mubr.f32.gmra.mxu0 %v1094
    %v1234 = vpop.f32.mrf.mxu0
    %v1235 = vadd.f32 0.0, %v1234
    %v1236 = vpop.f32.mrf.mxu0
    %v1237 = vadd.f32 0.0, %v1236
    %1238 = vmatprep.mubr.f32.mxu0 0.0
    %1239 = vmatmul.mubr.f32.gmra.mxu0 %v1097
    %v1240 = vpop.f32.mrf.mxu0
    %v1241 = vadd.f32 0.0, %v1240
    %v1242 = vpop.f32.mrf.mxu0
    %v1243 = vadd.f32 0.0, %v1242
    %1244 = vmatprep.mubr.f32.mxu0 0.0
    %1245 = vmatmul.mubr.f32.gmra.mxu0 %v1100
    %v1246 = vpop.f32.mrf.mxu0
    %v1247 = vadd.f32 0.0, %v1246
    %v1248 = vpop.f32.mrf.mxu0
    %v1249 = vadd.f32 0.0, %v1248
    %1250 = vmatprep.mubr.f32.mxu0 0.0
    %1251 = vmatmul.mubr.f32.gmra.mxu0 %v1103
    %v1252 = vpop.f32.mrf.mxu0
    %v1253 = vadd.f32 0.0, %v1252
    %v1254 = vpop.f32.mrf.mxu0
    %v1255 = vadd.f32 0.0, %v1254
    %1256 = vmatprep.mubr.f32.mxu0 0.0
    %1257 = vmatmul.mubr.f32.gmra.mxu0 %v1106
    %v1258 = vpop.f32.mrf.mxu0
    %v1259 = vadd.f32 0.0, %v1258
    %v1260 = vpop.f32.mrf.mxu0
    %v1261 = vadd.f32 0.0, %v1260
    %1262 = vmatprep.mubr.f32.mxu0 0.0
    %1263 = vmatmul.mubr.f32.gmra.mxu0 %v1109
    %v1264 = vpop.f32.mrf.mxu0
    %v1265 = vadd.f32 0.0, %v1264
    %v1266 = vpop.f32.mrf.mxu0
    %v1267 = vadd.f32 0.0, %v1266
    %1268 = vmatprep.mubr.f32.mxu0 0.0
    %1269 = vmatmul.mubr.f32.gmra.mxu0 %v1112
    %v1270 = vpop.f32.mrf.mxu0
    %v1271 = vadd.f32 0.0, %v1270
    %v1272 = vpop.f32.mrf.mxu0
    %v1273 = vadd.f32 0.0, %v1272
    %1274 = vdwg.mxu0
    %1275 = vmatprep.subr.mxu0 0.0
    %1276 = vmatpush1.msra.mxu0 0.0
    %1277 = vmatprep.subr.mxu0 0.0
    %1278 = vmatpush1.msra.mxu0 0.0
    %1279 = vmatprep.subr.mxu0 0.0
    %1280 = vmatpush1.msra.mxu0 0.0
    %1281 = vmatprep.subr.mxu0 0.0
    %1282 = vmatpush1.msra.mxu0 0.0
    %1283 = vmatprep.subr.mxu0 0.0
    %1284 = vmatpush1.msra.mxu0 0.0
    %1285 = vmatprep.subr.mxu0 0.0
    %1286 = vmatpush1.msra.mxu0 0.0
    %1287 = vmatprep.subr.mxu0 0.0
    %1288 = vmatpush1.msra.mxu0 0.0
    %1289 = vmatprep.subr.mxu0 0.0
    %1290 = vmatpush1.msra.mxu0 0.0
    %1291 = vmatprep.subr.mxu0 0.0
    %1292 = vmatpush1.msra.mxu0 0.0
    %1293 = vmatprep.subr.mxu0 0.0
    %1294 = vmatpush1.msra.mxu0 0.0
    %1295 = vmatprep.subr.mxu0 0.0
    %1296 = vmatpush1.msra.mxu0 0.0
    %1297 = vmatprep.subr.mxu0 0.0
    %1298 = vmatpush1.msra.mxu0 0.0
    %1299 = vmatprep.subr.mxu0 0.0
    %1300 = vmatpush1.msra.mxu0 0.0
    %1301 = vmatprep.subr.mxu0 0.0
    %1302 = vmatpush1.msra.mxu0 0.0
    %1303 = vmatprep.subr.mxu0 0.0
    %1304 = vmatpush1.msra.mxu0 0.0
    %1305 = vmatprep.subr.mxu0 %v1064
    %1306 = vmatpush1.msra.mxu0 %v1063
    %1307 = vmatprep.subr.mxu0 0.0
    %1308 = vmatpush2.msra.mxu0 0.0
    %1309 = vmatprep.subr.mxu0 0.0
    %1310 = vmatpush2.msra.mxu0 0.0
    %1311 = vmatprep.subr.mxu0 0.0
    %1312 = vmatpush2.msra.mxu0 0.0
    %1313 = vmatprep.subr.mxu0 0.0
    %1314 = vmatpush2.msra.mxu0 0.0
    %1315 = vmatprep.subr.mxu0 0.0
    %1316 = vmatpush2.msra.mxu0 0.0
    %1317 = vmatprep.subr.mxu0 0.0
    %1318 = vmatpush2.msra.mxu0 0.0
    %1319 = vmatprep.subr.mxu0 0.0
    %1320 = vmatpush2.msra.mxu0 0.0
    %1321 = vmatprep.subr.mxu0 0.0
    %1322 = vmatpush2.msra.mxu0 0.0
    %1323 = vmatprep.subr.mxu0 0.0
    %1324 = vmatpush2.msra.mxu0 0.0
    %1325 = vmatprep.subr.mxu0 0.0
    %1326 = vmatpush2.msra.mxu0 0.0
    %1327 = vmatprep.subr.mxu0 0.0
    %1328 = vmatpush2.msra.mxu0 0.0
    %1329 = vmatprep.subr.mxu0 0.0
    %1330 = vmatpush2.msra.mxu0 0.0
    %1331 = vmatprep.subr.mxu0 0.0
    %1332 = vmatpush2.msra.mxu0 0.0
    %1333 = vmatprep.subr.mxu0 0.0
    %1334 = vmatpush2.msra.mxu0 0.0
    %1335 = vmatprep.subr.mxu0 0.0
    %1336 = vmatpush2.msra.mxu0 0.0
    %1337 = vmatprep.subr.mxu0 0.0
    %1338 = vmatpush2.msra.mxu0 0.0
    %1339 = vmatprep.mubr.f32.mxu0 0.0
    %1340 = vmatmul.mubr.f32.gmra.mxu0 %v1067
    %v1341 = vpop.f32.mrf.mxu0
    %v1342 = vadd.f32 0.0, %v1341
    %v1343 = vpop.f32.mrf.mxu0
    %v1344 = vadd.f32 0.0, %v1343
    %1345 = vmatprep.mubr.f32.mxu0 0.0
    %1346 = vmatmul.mubr.f32.gmra.mxu0 %v1070
    %v1347 = vpop.f32.mrf.mxu0
    %v1348 = vadd.f32 0.0, %v1347
    %v1349 = vpop.f32.mrf.mxu0
    %v1350 = vadd.f32 0.0, %v1349
    %1351 = vmatprep.mubr.f32.mxu0 0.0
    %1352 = vmatmul.mubr.f32.gmra.mxu0 %v1073
    %v1353 = vpop.f32.mrf.mxu0
    %v1354 = vadd.f32 0.0, %v1353
    %v1355 = vpop.f32.mrf.mxu0
    %v1356 = vadd.f32 0.0, %v1355
    %1357 = vmatprep.mubr.f32.mxu0 0.0
    %1358 = vmatmul.mubr.f32.gmra.mxu0 %v1076
    %v1359 = vpop.f32.mrf.mxu0
    %v1360 = vadd.f32 0.0, %v1359
    %v1361 = vpop.f32.mrf.mxu0
    %v1362 = vadd.f32 0.0, %v1361
    %1363 = vmatprep.mubr.f32.mxu0 0.0
    %1364 = vmatmul.mubr.f32.gmra.mxu0 %v1079
    %v1365 = vpop.f32.mrf.mxu0
    %v1366 = vadd.f32 0.0, %v1365
    %v1367 = vpop.f32.mrf.mxu0
    %v1368 = vadd.f32 0.0, %v1367
    %1369 = vmatprep.mubr.f32.mxu0 0.0
    %1370 = vmatmul.mubr.f32.gmra.mxu0 %v1082
    %v1371 = vpop.f32.mrf.mxu0
    %v1372 = vadd.f32 0.0, %v1371
    %v1373 = vpop.f32.mrf.mxu0
    %v1374 = vadd.f32 0.0, %v1373
    %1375 = vmatprep.mubr.f32.mxu0 0.0
    %1376 = vmatmul.mubr.f32.gmra.mxu0 %v1085
    %v1377 = vpop.f32.mrf.mxu0
    %v1378 = vadd.f32 0.0, %v1377
    %v1379 = vpop.f32.mrf.mxu0
    %v1380 = vadd.f32 0.0, %v1379
    %1381 = vmatprep.mubr.f32.mxu0 0.0
    %1382 = vmatmul.mubr.f32.gmra.mxu0 %v1088
    %v1383 = vpop.f32.mrf.mxu0
    %v1384 = vadd.f32 0.0, %v1383
    %v1385 = vpop.f32.mrf.mxu0
    %v1386 = vadd.f32 0.0, %v1385
    %1387 = vmatprep.mubr.f32.mxu0 0.0
    %1388 = vmatmul.mubr.f32.gmra.mxu0 %v1091
    %v1389 = vpop.f32.mrf.mxu0
    %v1390 = vadd.f32 0.0, %v1389
    %v1391 = vpop.f32.mrf.mxu0
    %v1392 = vadd.f32 0.0, %v1391
    %1393 = vmatprep.mubr.f32.mxu0 0.0
    %1394 = vmatmul.mubr.f32.gmra.mxu0 %v1094
    %v1395 = vpop.f32.mrf.mxu0
    %v1396 = vadd.f32 0.0, %v1395
    %v1397 = vpop.f32.mrf.mxu0
    %v1398 = vadd.f32 0.0, %v1397
    %1399 = vmatprep.mubr.f32.mxu0 0.0
    %1400 = vmatmul.mubr.f32.gmra.mxu0 %v1097
    %v1401 = vpop.f32.mrf.mxu0
    %v1402 = vadd.f32 0.0, %v1401
    %v1403 = vpop.f32.mrf.mxu0
    %v1404 = vadd.f32 0.0, %v1403
    %1405 = vmatprep.mubr.f32.mxu0 0.0
    %1406 = vmatmul.mubr.f32.gmra.mxu0 %v1100
    %v1407 = vpop.f32.mrf.mxu0
    %v1408 = vadd.f32 0.0, %v1407
    %v1409 = vpop.f32.mrf.mxu0
    %v1410 = vadd.f32 0.0, %v1409
    %1411 = vmatprep.mubr.f32.mxu0 0.0
    %1412 = vmatmul.mubr.f32.gmra.mxu0 %v1103
    %v1413 = vpop.f32.mrf.mxu0
    %v1414 = vadd.f32 0.0, %v1413
    %v1415 = vpop.f32.mrf.mxu0
    %v1416 = vadd.f32 0.0, %v1415
    %1417 = vmatprep.mubr.f32.mxu0 0.0
    %1418 = vmatmul.mubr.f32.gmra.mxu0 %v1106
    %v1419 = vpop.f32.mrf.mxu0
    %v1420 = vadd.f32 0.0, %v1419
    %v1421 = vpop.f32.mrf.mxu0
    %v1422 = vadd.f32 0.0, %v1421
    %1423 = vmatprep.mubr.f32.mxu0 0.0
    %1424 = vmatmul.mubr.f32.gmra.mxu0 %v1109
    %v1425 = vpop.f32.mrf.mxu0
    %v1426 = vadd.f32 0.0, %v1425
    %v1427 = vpop.f32.mrf.mxu0
    %v1428 = vadd.f32 0.0, %v1427
    %1429 = vmatprep.mubr.f32.mxu0 0.0
    %1430 = vmatmul.mubr.f32.gmra.mxu0 %v1112
    %v1431 = vpop.f32.mrf.mxu0
    %v1432 = vadd.f32 0.0, %v1431
    %v1433 = vpop.f32.mrf.mxu0
    %v1434 = vadd.f32 0.0, %v1433
    %1435 = vdwg.mxu0
    %v1628 = vunpack.c.l.b16 %v194
    %v1629 = vunpack.c.h.b16 %v194
    %v1630 = vunpack.c.l.b16 %v195
    %v1631 = vunpack.c.h.b16 %v195
    %v1632 = vunpack.c.l.b16 %v196
    %v1633 = vunpack.c.h.b16 %v196
    %v1634 = vunpack.c.l.b16 %v197
    %v1635 = vunpack.c.h.b16 %v197
    %v1636 = vunpack.c.l.b16 %v198
    %v1637 = vunpack.c.h.b16 %v198
    %v1638 = vunpack.c.l.b16 %v199
    %v1639 = vunpack.c.h.b16 %v199
    %v1640 = vunpack.c.l.b16 %v200
    %v1641 = vunpack.c.h.b16 %v200
    %v1642 = vunpack.c.l.b16 %v201
    %v1643 = vunpack.c.h.b16 %v201
    %v1644 = vunpack.c.l.b16 %v202
    %v1645 = vunpack.c.h.b16 %v202
    %v1646 = vunpack.c.l.b16 %v203
    %v1647 = vunpack.c.h.b16 %v203
    %v1648 = vunpack.c.l.b16 %v204
    %v1649 = vunpack.c.h.b16 %v204
    %v1650 = vunpack.c.l.b16 %v205
    %v1651 = vunpack.c.h.b16 %v205
    %v1652 = vunpack.c.l.b16 %v206
    %v1653 = vunpack.c.h.b16 %v206
    %v1654 = vunpack.c.l.b16 %v207
    %v1655 = vunpack.c.h.b16 %v207
    %v1656 = vunpack.c.l.b16 %v208
    %v1657 = vunpack.c.h.b16 %v208
    %v1658 = vunpack.c.l.b16 %v209
    %v1659 = vunpack.c.h.b16 %v209
    %v1660 = vunpack.c.l.b16 %v210
    %v1661 = vunpack.c.h.b16 %v210
    %v1662 = vunpack.c.l.b16 %v211
    %v1663 = vunpack.c.h.b16 %v211
    %v1664 = vunpack.c.l.b16 %v212
    %v1665 = vunpack.c.h.b16 %v212
    %v1666 = vunpack.c.l.b16 %v213
    %v1667 = vunpack.c.h.b16 %v213
    %v1668 = vunpack.c.l.b16 %v214
    %v1669 = vunpack.c.h.b16 %v214
    %v1670 = vunpack.c.l.b16 %v215
    %v1671 = vunpack.c.h.b16 %v215
    %v1672 = vunpack.c.l.b16 %v216
    %v1673 = vunpack.c.h.b16 %v216
    %v1674 = vunpack.c.l.b16 %v217
    %v1675 = vunpack.c.h.b16 %v217
    %v1676 = vunpack.c.l.b16 %v218
    %v1677 = vunpack.c.h.b16 %v218
    %v1678 = vunpack.c.l.b16 %v219
    %v1679 = vunpack.c.h.b16 %v219
    %v1680 = vunpack.c.l.b16 %v220
    %v1681 = vunpack.c.h.b16 %v220
    %v1682 = vunpack.c.l.b16 %v221
    %v1683 = vunpack.c.h.b16 %v221
    %v1684 = vunpack.c.l.b16 %v222
    %v1685 = vunpack.c.h.b16 %v222
    %v1686 = vunpack.c.l.b16 %v223
    %v1687 = vunpack.c.h.b16 %v223
    %v1688 = vunpack.c.l.b16 %v224
    %v1689 = vunpack.c.h.b16 %v224
    %v1690 = vunpack.c.l.b16 %v225
    %v1691 = vunpack.c.h.b16 %v225
    %v1692 = vunpack.c.l.b16 %v226
    %v1693 = vunpack.c.h.b16 %v226
    %v1694 = vunpack.c.l.b16 %v227
    %v1695 = vunpack.c.h.b16 %v227
    %v1696 = vunpack.c.l.b16 %v228
    %v1697 = vunpack.c.h.b16 %v228
    %v1698 = vunpack.c.l.b16 %v229
    %v1699 = vunpack.c.h.b16 %v229
    %v1700 = vunpack.c.l.b16 %v230
    %v1701 = vunpack.c.h.b16 %v230
    %v1702 = vunpack.c.l.b16 %v231
    %v1703 = vunpack.c.h.b16 %v231
    %v1704 = vunpack.c.l.b16 %v232
    %v1705 = vunpack.c.h.b16 %v232
    %v1706 = vunpack.c.l.b16 %v233
    %v1707 = vunpack.c.h.b16 %v233
    %v1708 = vunpack.c.l.b16 %v234
    %v1709 = vunpack.c.h.b16 %v234
    %v1710 = vunpack.c.l.b16 %v235
    %v1711 = vunpack.c.h.b16 %v235
    %v1712 = vunpack.c.l.b16 %v236
    %v1713 = vunpack.c.h.b16 %v236
    %v1714 = vunpack.c.l.b16 %v237
    %v1715 = vunpack.c.h.b16 %v237
    %v1716 = vunpack.c.l.b16 %v238
    %v1717 = vunpack.c.h.b16 %v238
    %v1718 = vunpack.c.l.b16 %v239
    %v1719 = vunpack.c.h.b16 %v239
    %v1720 = vunpack.c.l.b16 %v240
    %v1721 = vunpack.c.h.b16 %v240
    %v1722 = vunpack.c.l.b16 %v241
    %v1723 = vunpack.c.h.b16 %v241
    %v1724 = vunpack.c.l.b16 %v242
    %v1725 = vunpack.c.h.b16 %v242
    %v1726 = vunpack.c.l.b16 %v243
    %v1727 = vunpack.c.h.b16 %v243
    %v1728 = vunpack.c.l.b16 %v244
    %v1729 = vunpack.c.h.b16 %v244
    %v1730 = vunpack.c.l.b16 %v245
    %v1731 = vunpack.c.h.b16 %v245
    %v1732 = vunpack.c.l.b16 %v246
    %v1733 = vunpack.c.h.b16 %v246
    %v1734 = vunpack.c.l.b16 %v247
    %v1735 = vunpack.c.h.b16 %v247
    %v1736 = vunpack.c.l.b16 %v248
    %v1737 = vunpack.c.h.b16 %v248
    %v1738 = vunpack.c.l.b16 %v249
    %v1739 = vunpack.c.h.b16 %v249
    %v1740 = vunpack.c.l.b16 %v250
    %v1741 = vunpack.c.h.b16 %v250
    %v1742 = vunpack.c.l.b16 %v251
    %v1743 = vunpack.c.h.b16 %v251
    %v1744 = vunpack.c.l.b16 %v252
    %v1745 = vunpack.c.h.b16 %v252
    %v1746 = vunpack.c.l.b16 %v253
    %v1747 = vunpack.c.h.b16 %v253
    %v1748 = vunpack.c.l.b16 %v254
    %v1749 = vunpack.c.h.b16 %v254
    %v1750 = vunpack.c.l.b16 %v255
    %v1751 = vunpack.c.h.b16 %v255
    %v1752 = vunpack.c.l.b16 %v256
    %v1753 = vunpack.c.h.b16 %v256
    %v1754 = vunpack.c.l.b16 %v257
    %v1755 = vunpack.c.h.b16 %v257
    %v1756 = vunpack.c.l.b16 %v258
    %v1757 = vunpack.c.h.b16 %v258
    %v1758 = vunpack.c.l.b16 %v259
    %v1759 = vunpack.c.h.b16 %v259
    %v1760 = vunpack.c.l.b16 %v260
    %v1761 = vunpack.c.h.b16 %v260
    %v1762 = vunpack.c.l.b16 %v261
    %v1763 = vunpack.c.h.b16 %v261
    %v1764 = vunpack.c.l.b16 %v262
    %v1765 = vunpack.c.h.b16 %v262
    %v1766 = vunpack.c.l.b16 %v263
    %v1767 = vunpack.c.h.b16 %v263
    %v1768 = vunpack.c.l.b16 %v264
    %v1769 = vunpack.c.h.b16 %v264
    %v1770 = vunpack.c.l.b16 %v265
    %v1771 = vunpack.c.h.b16 %v265
    %v1772 = vunpack.c.l.b16 %v266
    %v1773 = vunpack.c.h.b16 %v266
    %v1774 = vunpack.c.l.b16 %v267
    %v1775 = vunpack.c.h.b16 %v267
    %v1776 = vunpack.c.l.b16 %v268
    %v1777 = vunpack.c.h.b16 %v268
    %v1778 = vunpack.c.l.b16 %v269
    %v1779 = vunpack.c.h.b16 %v269
    %v1780 = vunpack.c.l.b16 %v270
    %v1781 = vunpack.c.h.b16 %v270
    %v1782 = vunpack.c.l.b16 %v271
    %v1783 = vunpack.c.h.b16 %v271
    %v1784 = vunpack.c.l.b16 %v272
    %v1785 = vunpack.c.h.b16 %v272
    %v1786 = vunpack.c.l.b16 %v273
    %v1787 = vunpack.c.h.b16 %v273
    %v1788 = vunpack.c.l.b16 %v274
    %v1789 = vunpack.c.h.b16 %v274
    %v1790 = vunpack.c.l.b16 %v275
    %v1791 = vunpack.c.h.b16 %v275
    %v1792 = vunpack.c.l.b16 %v276
    %v1793 = vunpack.c.h.b16 %v276
    %v1794 = vunpack.c.l.b16 %v277
    %v1795 = vunpack.c.h.b16 %v277
    %v1796 = vunpack.c.l.b16 %v278
    %v1797 = vunpack.c.h.b16 %v278
    %v1798 = vunpack.c.l.b16 %v279
    %v1799 = vunpack.c.h.b16 %v279
    %v1800 = vunpack.c.l.b16 %v280
    %v1801 = vunpack.c.h.b16 %v280
    %v1802 = vunpack.c.l.b16 %v281
    %v1803 = vunpack.c.h.b16 %v281
    %v1804 = vunpack.c.l.b16 %v282
    %v1805 = vunpack.c.h.b16 %v282
    %v1806 = vunpack.c.l.b16 %v283
    %v1807 = vunpack.c.h.b16 %v283
    %v1808 = vunpack.c.l.b16 %v284
    %v1809 = vunpack.c.h.b16 %v284
    %v1810 = vunpack.c.l.b16 %v285
    %v1811 = vunpack.c.h.b16 %v285
    %v1812 = vunpack.c.l.b16 %v286
    %v1813 = vunpack.c.h.b16 %v286
    %v1814 = vunpack.c.l.b16 %v287
    %v1815 = vunpack.c.h.b16 %v287
    %v1816 = vunpack.c.l.b16 %v288
    %v1817 = vunpack.c.h.b16 %v288
    %v1818 = vunpack.c.l.b16 %v289
    %v1819 = vunpack.c.h.b16 %v289
    %v1820 = vunpack.c.l.b16 %v290
    %v1821 = vunpack.c.h.b16 %v290
    %v1822 = vunpack.c.l.b16 %v291
    %v1823 = vunpack.c.h.b16 %v291
    %v1824 = vunpack.c.l.b16 %v292
    %v1825 = vunpack.c.h.b16 %v292
    %v1826 = vunpack.c.l.b16 %v293
    %v1827 = vunpack.c.h.b16 %v293
    %v1828 = vunpack.c.l.b16 %v294
    %v1829 = vunpack.c.h.b16 %v294
    %v1830 = vunpack.c.l.b16 %v295
    %v1831 = vunpack.c.h.b16 %v295
    %v1832 = vunpack.c.l.b16 %v296
    %v1833 = vunpack.c.h.b16 %v296
    %v1834 = vunpack.c.l.b16 %v297
    %v1835 = vunpack.c.h.b16 %v297
    %v1836 = vunpack.c.l.b16 %v298
    %v1837 = vunpack.c.h.b16 %v298
    %v1838 = vunpack.c.l.b16 %v299
    %v1839 = vunpack.c.h.b16 %v299
    %v1840 = vunpack.c.l.b16 %v300
    %v1841 = vunpack.c.h.b16 %v300
    %v1842 = vunpack.c.l.b16 %v301
    %v1843 = vunpack.c.h.b16 %v301
    %v1844 = vunpack.c.l.b16 %v302
    %v1845 = vunpack.c.h.b16 %v302
    %v1846 = vunpack.c.l.b16 %v303
    %v1847 = vunpack.c.h.b16 %v303
    %v1848 = vunpack.c.l.b16 %v304
    %v1849 = vunpack.c.h.b16 %v304
    %v1850 = vunpack.c.l.b16 %v305
    %v1851 = vunpack.c.h.b16 %v305
    %v1852 = vunpack.c.l.b16 %v306
    %v1853 = vunpack.c.h.b16 %v306
    %v1854 = vunpack.c.l.b16 %v307
    %v1855 = vunpack.c.h.b16 %v307
    %v1856 = vunpack.c.l.b16 %v308
    %v1857 = vunpack.c.h.b16 %v308
    %v1858 = vunpack.c.l.b16 %v309
    %v1859 = vunpack.c.h.b16 %v309
    %v1860 = vunpack.c.l.b16 %v310
    %v1861 = vunpack.c.h.b16 %v310
    %v1862 = vunpack.c.l.b16 %v311
    %v1863 = vunpack.c.h.b16 %v311
    %v1864 = vunpack.c.l.b16 %v312
    %v1865 = vunpack.c.h.b16 %v312
    %v1866 = vunpack.c.l.b16 %v313
    %v1867 = vunpack.c.h.b16 %v313
    %v1868 = vunpack.c.l.b16 %v314
    %v1869 = vunpack.c.h.b16 %v314
    %v1870 = vunpack.c.l.b16 %v315
    %v1871 = vunpack.c.h.b16 %v315
    %v1872 = vunpack.c.l.b16 %v316
    %v1873 = vunpack.c.h.b16 %v316
    %v1874 = vunpack.c.l.b16 %v317
    %v1875 = vunpack.c.h.b16 %v317
    %v1876 = vunpack.c.l.b16 %v318
    %v1877 = vunpack.c.h.b16 %v318
    %v1878 = vunpack.c.l.b16 %v319
    %v1879 = vunpack.c.h.b16 %v319
    %v1880 = vunpack.c.l.b16 %v320
    %v1881 = vunpack.c.h.b16 %v320
    %v1882 = vunpack.c.l.b16 %v321
    %v1883 = vunpack.c.h.b16 %v321
    %v1884 = vunpack.c.l.b16 %v322
    %v1885 = vunpack.c.h.b16 %v322
    %v1886 = vunpack.c.l.b16 %v323
    %v1887 = vunpack.c.h.b16 %v323
    %v1888 = vunpack.c.l.b16 %v324
    %v1889 = vunpack.c.h.b16 %v324
    %v1890 = vunpack.c.l.b16 %v325
    %v1891 = vunpack.c.h.b16 %v325
    %v1892 = vunpack.c.l.b16 %v326
    %v1893 = vunpack.c.h.b16 %v326
    %v1894 = vunpack.c.l.b16 %v327
    %v1895 = vunpack.c.h.b16 %v327
    %v1896 = vunpack.c.l.b16 %v328
    %v1897 = vunpack.c.h.b16 %v328
    %v1898 = vunpack.c.l.b16 %v329
    %v1899 = vunpack.c.h.b16 %v329
    %v1900 = vunpack.c.l.b16 %v330
    %v1901 = vunpack.c.h.b16 %v330
    %v1902 = vunpack.c.l.b16 %v331
    %v1903 = vunpack.c.h.b16 %v331
    %v1904 = vunpack.c.l.b16 %v332
    %v1905 = vunpack.c.h.b16 %v332
    %v1906 = vunpack.c.l.b16 %v333
    %v1907 = vunpack.c.h.b16 %v333
    %v1908 = vunpack.c.l.b16 %v334
    %v1909 = vunpack.c.h.b16 %v334
    %v1910 = vunpack.c.l.b16 %v335
    %v1911 = vunpack.c.h.b16 %v335
    %v1912 = vunpack.c.l.b16 %v336
    %v1913 = vunpack.c.h.b16 %v336
    %v1914 = vunpack.c.l.b16 %v337
    %v1915 = vunpack.c.h.b16 %v337
    %v1916 = vunpack.c.l.b16 %v338
    %v1917 = vunpack.c.h.b16 %v338
    %v1918 = vunpack.c.l.b16 %v339
    %v1919 = vunpack.c.h.b16 %v339
    %v1920 = vunpack.c.l.b16 %v340
    %v1921 = vunpack.c.h.b16 %v340
    %v1922 = vunpack.c.l.b16 %v341
    %v1923 = vunpack.c.h.b16 %v341
    %v1924 = vunpack.c.l.b16 %v342
    %v1925 = vunpack.c.h.b16 %v342
    %v1926 = vunpack.c.l.b16 %v343
    %v1927 = vunpack.c.h.b16 %v343
    %v1928 = vunpack.c.l.b16 %v344
    %v1929 = vunpack.c.h.b16 %v344
    %v1930 = vunpack.c.l.b16 %v345
    %v1931 = vunpack.c.h.b16 %v345
    %v1932 = vunpack.c.l.b16 %v346
    %v1933 = vunpack.c.h.b16 %v346
    %v1934 = vunpack.c.l.b16 %v347
    %v1935 = vunpack.c.h.b16 %v347
    %v1936 = vunpack.c.l.b16 %v348
    %v1937 = vunpack.c.h.b16 %v348
    %v1938 = vunpack.c.l.b16 %v349
    %v1939 = vunpack.c.h.b16 %v349
    %v1940 = vunpack.c.l.b16 %v350
    %v1941 = vunpack.c.h.b16 %v350
    %v1942 = vunpack.c.l.b16 %v351
    %v1943 = vunpack.c.h.b16 %v351
    %v1944 = vunpack.c.l.b16 %v352
    %v1945 = vunpack.c.h.b16 %v352
    %v1946 = vunpack.c.l.b16 %v353
    %v1947 = vunpack.c.h.b16 %v353
    %v1948 = vunpack.c.l.b16 %v354
    %v1949 = vunpack.c.h.b16 %v354
    %v1950 = vunpack.c.l.b16 %v355
    %v1951 = vunpack.c.h.b16 %v355
    %v1952 = vunpack.c.l.b16 %v356
    %v1953 = vunpack.c.h.b16 %v356
    %v1954 = vunpack.c.l.b16 %v357
    %v1955 = vunpack.c.h.b16 %v357
    %v1956 = vunpack.c.l.b16 %v358
    %v1957 = vunpack.c.h.b16 %v358
    %v1958 = vunpack.c.l.b16 %v359
    %v1959 = vunpack.c.h.b16 %v359
    %v1960 = vunpack.c.l.b16 %v360
    %v1961 = vunpack.c.h.b16 %v360
    %v1962 = vunpack.c.l.b16 %v361
    %v1963 = vunpack.c.h.b16 %v361
    %v1964 = vunpack.c.l.b16 %v362
    %v1965 = vunpack.c.h.b16 %v362
    %v1966 = vunpack.c.l.b16 %v363
    %v1967 = vunpack.c.h.b16 %v363
    %v1968 = vunpack.c.l.b16 %v364
    %v1969 = vunpack.c.h.b16 %v364
    %v1970 = vunpack.c.l.b16 %v365
    %v1971 = vunpack.c.h.b16 %v365
    %v1972 = vunpack.c.l.b16 %v366
    %v1973 = vunpack.c.h.b16 %v366
    %v1974 = vunpack.c.l.b16 %v367
    %v1975 = vunpack.c.h.b16 %v367
    %v1976 = vunpack.c.l.b16 %v368
    %v1977 = vunpack.c.h.b16 %v368
    %v1978 = vunpack.c.l.b16 %v369
    %v1979 = vunpack.c.h.b16 %v369
    %v1980 = vunpack.c.l.b16 %v370
    %v1981 = vunpack.c.h.b16 %v370
    %v1982 = vunpack.c.l.b16 %v371
    %v1983 = vunpack.c.h.b16 %v371
    %v1984 = vunpack.c.l.b16 %v372
    %v1985 = vunpack.c.h.b16 %v372
    %v1986 = vunpack.c.l.b16 %v373
    %v1987 = vunpack.c.h.b16 %v373
    %v1988 = vunpack.c.l.b16 %v374
    %v1989 = vunpack.c.h.b16 %v374
    %v1990 = vunpack.c.l.b16 %v375
    %v1991 = vunpack.c.h.b16 %v375
    %v1992 = vunpack.c.l.b16 %v376
    %v1993 = vunpack.c.h.b16 %v376
    %v1994 = vunpack.c.l.b16 %v377
    %v1995 = vunpack.c.h.b16 %v377
    %v1996 = vunpack.c.l.b16 %v378
    %v1997 = vunpack.c.h.b16 %v378
    %v1998 = vunpack.c.l.b16 %v379
    %v1999 = vunpack.c.h.b16 %v379
    %v2000 = vunpack.c.l.b16 %v380
    %v2001 = vunpack.c.h.b16 %v380
    %v2002 = vunpack.c.l.b16 %v381
    %v2003 = vunpack.c.h.b16 %v381
    %v2004 = vunpack.c.l.b16 %v382
    %v2005 = vunpack.c.h.b16 %v382
    %v2006 = vunpack.c.l.b16 %v383
    %v2007 = vunpack.c.h.b16 %v383
    %v2008 = vunpack.c.l.b16 %v384
    %v2009 = vunpack.c.h.b16 %v384
    %v2010 = vunpack.c.l.b16 %v385
    %v2011 = vunpack.c.h.b16 %v385
    %v2012 = vpack.c.b16 %v1632, %v1628
    %v2013 = vpack.c.b16 %v1633, %v1629
    %v2014 = vpack.c.b16 %v1634, %v1630
    %v2015 = vpack.c.b16 %v1635, %v1631
    %v2016 = vpack.c.b16 %v1640, %v1636
    %v2017 = vpack.c.b16 %v1641, %v1637
    %v2018 = vpack.c.b16 %v1642, %v1638
    %v2019 = vpack.c.b16 %v1643, %v1639
    %v2020 = vpack.c.b16 %v1648, %v1644
    %v2021 = vpack.c.b16 %v1649, %v1645
    %v2022 = vpack.c.b16 %v1650, %v1646
    %v2023 = vpack.c.b16 %v1651, %v1647
    %v2024 = vpack.c.b16 %v1656, %v1652
    %v2025 = vpack.c.b16 %v1657, %v1653
    %v2026 = vpack.c.b16 %v1658, %v1654
    %v2027 = vpack.c.b16 %v1659, %v1655
    %v2028 = vpack.c.b16 %v1664, %v1660
    %v2029 = vpack.c.b16 %v1665, %v1661
    %v2030 = vpack.c.b16 %v1666, %v1662
    %v2031 = vpack.c.b16 %v1667, %v1663
    %v2032 = vpack.c.b16 %v1672, %v1668
    %v2033 = vpack.c.b16 %v1673, %v1669
    %v2034 = vpack.c.b16 %v1674, %v1670
    %v2035 = vpack.c.b16 %v1675, %v1671
    %v2036 = vpack.c.b16 %v1680, %v1676
    %v2037 = vpack.c.b16 %v1681, %v1677
    %v2038 = vpack.c.b16 %v1682, %v1678
    %v2039 = vpack.c.b16 %v1683, %v1679
    %v2040 = vpack.c.b16 %v1688, %v1684
    %v2041 = vpack.c.b16 %v1689, %v1685
    %v2042 = vpack.c.b16 %v1690, %v1686
    %v2043 = vpack.c.b16 %v1691, %v1687
    %v2044 = vpack.c.b16 %v1696, %v1692
    %v2045 = vpack.c.b16 %v1697, %v1693
    %v2046 = vpack.c.b16 %v1698, %v1694
    %v2047 = vpack.c.b16 %v1699, %v1695
    %v2048 = vpack.c.b16 %v1704, %v1700
    %v2049 = vpack.c.b16 %v1705, %v1701
    %v2050 = vpack.c.b16 %v1706, %v1702
    %v2051 = vpack.c.b16 %v1707, %v1703
    %v2052 = vpack.c.b16 %v1712, %v1708
    %v2053 = vpack.c.b16 %v1713, %v1709
    %v2054 = vpack.c.b16 %v1714, %v1710
    %v2055 = vpack.c.b16 %v1715, %v1711
    %v2056 = vpack.c.b16 %v1720, %v1716
    %v2057 = vpack.c.b16 %v1721, %v1717
    %v2058 = vpack.c.b16 %v1722, %v1718
    %v2059 = vpack.c.b16 %v1723, %v1719
    %v2060 = vpack.c.b16 %v1728, %v1724
    %v2061 = vpack.c.b16 %v1729, %v1725
    %v2062 = vpack.c.b16 %v1730, %v1726
    %v2063 = vpack.c.b16 %v1731, %v1727
    %v2064 = vpack.c.b16 %v1736, %v1732
    %v2065 = vpack.c.b16 %v1737, %v1733
    %v2066 = vpack.c.b16 %v1738, %v1734
    %v2067 = vpack.c.b16 %v1739, %v1735
    %v2068 = vpack.c.b16 %v1744, %v1740
    %v2069 = vpack.c.b16 %v1745, %v1741
    %v2070 = vpack.c.b16 %v1746, %v1742
    %v2071 = vpack.c.b16 %v1747, %v1743
    %v2072 = vpack.c.b16 %v1752, %v1748
    %v2073 = vpack.c.b16 %v1753, %v1749
    %v2074 = vpack.c.b16 %v1754, %v1750
    %v2075 = vpack.c.b16 %v1755, %v1751
    %v2076 = vpack.c.b16 %v1760, %v1756
    %v2077 = vpack.c.b16 %v1761, %v1757
    %v2078 = vpack.c.b16 %v1762, %v1758
    %v2079 = vpack.c.b16 %v1763, %v1759
    %v2080 = vpack.c.b16 %v1768, %v1764
    %v2081 = vpack.c.b16 %v1769, %v1765
    %v2082 = vpack.c.b16 %v1770, %v1766
    %v2083 = vpack.c.b16 %v1771, %v1767
    %v2084 = vpack.c.b16 %v1776, %v1772
    %v2085 = vpack.c.b16 %v1777, %v1773
    %v2086 = vpack.c.b16 %v1778, %v1774
    %v2087 = vpack.c.b16 %v1779, %v1775
    %v2088 = vpack.c.b16 %v1784, %v1780
    %v2089 = vpack.c.b16 %v1785, %v1781
    %v2090 = vpack.c.b16 %v1786, %v1782
    %v2091 = vpack.c.b16 %v1787, %v1783
    %v2092 = vpack.c.b16 %v1792, %v1788
    %v2093 = vpack.c.b16 %v1793, %v1789
    %v2094 = vpack.c.b16 %v1794, %v1790
    %v2095 = vpack.c.b16 %v1795, %v1791
    %v2096 = vpack.c.b16 %v1800, %v1796
    %v2097 = vpack.c.b16 %v1801, %v1797
    %v2098 = vpack.c.b16 %v1802, %v1798
    %v2099 = vpack.c.b16 %v1803, %v1799
    %v2100 = vpack.c.b16 %v1808, %v1804
    %v2101 = vpack.c.b16 %v1809, %v1805
    %v2102 = vpack.c.b16 %v1810, %v1806
    %v2103 = vpack.c.b16 %v1811, %v1807
    %v2104 = vpack.c.b16 %v1816, %v1812
    %v2105 = vpack.c.b16 %v1817, %v1813
    %v2106 = vpack.c.b16 %v1818, %v1814
    %v2107 = vpack.c.b16 %v1819, %v1815
    %v2108 = vpack.c.b16 %v1824, %v1820
    %v2109 = vpack.c.b16 %v1825, %v1821
    %v2110 = vpack.c.b16 %v1826, %v1822
    %v2111 = vpack.c.b16 %v1827, %v1823
    %v2112 = vpack.c.b16 %v1832, %v1828
    %v2113 = vpack.c.b16 %v1833, %v1829
    %v2114 = vpack.c.b16 %v1834, %v1830
    %v2115 = vpack.c.b16 %v1835, %v1831
    %v2116 = vpack.c.b16 %v1840, %v1836
    %v2117 = vpack.c.b16 %v1841, %v1837
    %v2118 = vpack.c.b16 %v1842, %v1838
    %v2119 = vpack.c.b16 %v1843, %v1839
    %v2120 = vpack.c.b16 %v1848, %v1844
    %v2121 = vpack.c.b16 %v1849, %v1845
    %v2122 = vpack.c.b16 %v1850, %v1846
    %v2123 = vpack.c.b16 %v1851, %v1847
    %v2124 = vpack.c.b16 %v1856, %v1852
    %v2125 = vpack.c.b16 %v1857, %v1853
    %v2126 = vpack.c.b16 %v1858, %v1854
    %v2127 = vpack.c.b16 %v1859, %v1855
    %v2128 = vpack.c.b16 %v1864, %v1860
    %v2129 = vpack.c.b16 %v1865, %v1861
    %v2130 = vpack.c.b16 %v1866, %v1862
    %v2131 = vpack.c.b16 %v1867, %v1863
    %v2132 = vpack.c.b16 %v1872, %v1868
    %v2133 = vpack.c.b16 %v1873, %v1869
    %v2134 = vpack.c.b16 %v1874, %v1870
    %v2135 = vpack.c.b16 %v1875, %v1871
    %v2136 = vpack.c.b16 %v1880, %v1876
    %v2137 = vpack.c.b16 %v1881, %v1877
    %v2138 = vpack.c.b16 %v1882, %v1878
    %v2139 = vpack.c.b16 %v1883, %v1879
    %v2140 = vpack.c.b16 %v1888, %v1884
    %v2141 = vpack.c.b16 %v1889, %v1885
    %v2142 = vpack.c.b16 %v1890, %v1886
    %v2143 = vpack.c.b16 %v1891, %v1887
    %v2144 = vpack.c.b16 %v1896, %v1892
    %v2145 = vpack.c.b16 %v1897, %v1893
    %v2146 = vpack.c.b16 %v1898, %v1894
    %v2147 = vpack.c.b16 %v1899, %v1895
    %v2148 = vpack.c.b16 %v1904, %v1900
    %v2149 = vpack.c.b16 %v1905, %v1901
    %v2150 = vpack.c.b16 %v1906, %v1902
    %v2151 = vpack.c.b16 %v1907, %v1903
    %v2152 = vpack.c.b16 %v1912, %v1908
    %v2153 = vpack.c.b16 %v1913, %v1909
    %v2154 = vpack.c.b16 %v1914, %v1910
    %v2155 = vpack.c.b16 %v1915, %v1911
    %v2156 = vpack.c.b16 %v1920, %v1916
    %v2157 = vpack.c.b16 %v1921, %v1917
    %v2158 = vpack.c.b16 %v1922, %v1918
    %v2159 = vpack.c.b16 %v1923, %v1919
    %v2160 = vpack.c.b16 %v1928, %v1924
    %v2161 = vpack.c.b16 %v1929, %v1925
    %v2162 = vpack.c.b16 %v1930, %v1926
    %v2163 = vpack.c.b16 %v1931, %v1927
    %v2164 = vpack.c.b16 %v1936, %v1932
    %v2165 = vpack.c.b16 %v1937, %v1933
    %v2166 = vpack.c.b16 %v1938, %v1934
    %v2167 = vpack.c.b16 %v1939, %v1935
    %v2168 = vpack.c.b16 %v1944, %v1940
    %v2169 = vpack.c.b16 %v1945, %v1941
    %v2170 = vpack.c.b16 %v1946, %v1942
    %v2171 = vpack.c.b16 %v1947, %v1943
    %v2172 = vpack.c.b16 %v1952, %v1948
    %v2173 = vpack.c.b16 %v1953, %v1949
    %v2174 = vpack.c.b16 %v1954, %v1950
    %v2175 = vpack.c.b16 %v1955, %v1951
    %v2176 = vpack.c.b16 %v1960, %v1956
    %v2177 = vpack.c.b16 %v1961, %v1957
    %v2178 = vpack.c.b16 %v1962, %v1958
    %v2179 = vpack.c.b16 %v1963, %v1959
    %v2180 = vpack.c.b16 %v1968, %v1964
    %v2181 = vpack.c.b16 %v1969, %v1965
    %v2182 = vpack.c.b16 %v1970, %v1966
    %v2183 = vpack.c.b16 %v1971, %v1967
    %v2184 = vpack.c.b16 %v1976, %v1972
    %v2185 = vpack.c.b16 %v1977, %v1973
    %v2186 = vpack.c.b16 %v1978, %v1974
    %v2187 = vpack.c.b16 %v1979, %v1975
    %v2188 = vpack.c.b16 %v1984, %v1980
    %v2189 = vpack.c.b16 %v1985, %v1981
    %v2190 = vpack.c.b16 %v1986, %v1982
    %v2191 = vpack.c.b16 %v1987, %v1983
    %v2192 = vpack.c.b16 %v1992, %v1988
    %v2193 = vpack.c.b16 %v1993, %v1989
    %v2194 = vpack.c.b16 %v1994, %v1990
    %v2195 = vpack.c.b16 %v1995, %v1991
    %v2196 = vpack.c.b16 %v2000, %v1996
    %v2197 = vpack.c.b16 %v2001, %v1997
    %v2198 = vpack.c.b16 %v2002, %v1998
    %v2199 = vpack.c.b16 %v2003, %v1999
    %v2200 = vpack.c.b16 %v2008, %v2004
    %v2201 = vpack.c.b16 %v2009, %v2005
    %v2202 = vpack.c.b16 %v2010, %v2006
    %v2203 = vpack.c.b16 %v2011, %v2007
    %2396 = vmatprep.subr.bf16.mxu0 %v2041
    %2397 = vmatpush1.bf16.msra.mxu0 %v2040
    %2398 = vmatprep.subr.bf16.mxu0 %v2037
    %2399 = vmatpush1.bf16.msra.mxu0 %v2036
    %2400 = vmatprep.subr.bf16.mxu0 %v2033
    %2401 = vmatpush1.bf16.msra.mxu0 %v2032
    %2402 = vmatprep.subr.bf16.mxu0 %v2029
    %2403 = vmatpush1.bf16.msra.mxu0 %v2028
    %2404 = vmatprep.subr.bf16.mxu0 %v2025
    %2405 = vmatpush1.bf16.msra.mxu0 %v2024
    %2406 = vmatprep.subr.bf16.mxu0 %v2021
    %2407 = vmatpush1.bf16.msra.mxu0 %v2020
    %2408 = vmatprep.subr.bf16.mxu0 %v2017
    %2409 = vmatpush1.bf16.msra.mxu0 %v2016
    %2410 = vmatprep.subr.bf16.mxu0 %v2013
    %2411 = vmatpush1.bf16.msra.mxu0 %v2012
    %2412 = vmatprep.subr.bf16.mxu0 %v2073
    %2413 = vmatpush2.bf16.msra.mxu0 %v2072
    %2414 = vmatprep.subr.bf16.mxu0 %v2069
    %2415 = vmatpush2.bf16.msra.mxu0 %v2068
    %2416 = vmatprep.subr.bf16.mxu0 %v2065
    %2417 = vmatpush2.bf16.msra.mxu0 %v2064
    %2418 = vmatprep.subr.bf16.mxu0 %v2061
    %2419 = vmatpush2.bf16.msra.mxu0 %v2060
    %2420 = vmatprep.subr.bf16.mxu0 %v2057
    %2421 = vmatpush2.bf16.msra.mxu0 %v2056
    %2422 = vmatprep.subr.bf16.mxu0 %v2053
    %2423 = vmatpush2.bf16.msra.mxu0 %v2052
    %2424 = vmatprep.subr.bf16.mxu0 %v2049
    %2425 = vmatpush2.bf16.msra.mxu0 %v2048
    %2426 = vmatprep.subr.bf16.mxu0 %v2045
    %2427 = vmatpush2.bf16.msra.mxu0 %v2044
    %2428 = vmatprep.mubr.bf16.mxu0 %v147
    %2429 = vmatmul.mubr.bf16.gmra.mxu0 %v146
    %v2430 = vpop.f32.mrf.mxu0
    %v2431 = vadd.f32 %v1181, %v2430
    %v2432 = vpop.f32.mrf.mxu0
    %v2433 = vadd.f32 %v1183, %v2432
    %v2434 = vpop.f32.mrf.mxu0
    %v2435 = vadd.f32 %v1187, %v2434
    %v2436 = vpop.f32.mrf.mxu0
    %v2437 = vadd.f32 %v1189, %v2436
    %2438 = vmatprep.mubr.bf16.mxu0 %v153
    %2439 = vmatmul.mubr.bf16.gmra.mxu0 %v152
    %v2440 = vpop.f32.mrf.mxu0
    %v2441 = vadd.f32 %v1193, %v2440
    %v2442 = vpop.f32.mrf.mxu0
    %v2443 = vadd.f32 %v1195, %v2442
    %v2444 = vpop.f32.mrf.mxu0
    %v2445 = vadd.f32 %v1199, %v2444
    %v2446 = vpop.f32.mrf.mxu0
    %v2447 = vadd.f32 %v1201, %v2446
    %2448 = vmatprep.mubr.bf16.mxu0 %v159
    %2449 = vmatmul.mubr.bf16.gmra.mxu0 %v158
    %v2450 = vpop.f32.mrf.mxu0
    %v2451 = vadd.f32 %v1205, %v2450
    %v2452 = vpop.f32.mrf.mxu0
    %v2453 = vadd.f32 %v1207, %v2452
    %v2454 = vpop.f32.mrf.mxu0
    %v2455 = vadd.f32 %v1211, %v2454
    %v2456 = vpop.f32.mrf.mxu0
    %v2457 = vadd.f32 %v1213, %v2456
    %2458 = vmatprep.mubr.bf16.mxu0 %v165
    %2459 = vmatmul.mubr.bf16.gmra.mxu0 %v164
    %v2460 = vpop.f32.mrf.mxu0
    %v2461 = vadd.f32 %v1217, %v2460
    %v2462 = vpop.f32.mrf.mxu0
    %v2463 = vadd.f32 %v1219, %v2462
    %v2464 = vpop.f32.mrf.mxu0
    %v2465 = vadd.f32 %v1223, %v2464
    %v2466 = vpop.f32.mrf.mxu0
    %v2467 = vadd.f32 %v1225, %v2466
    %2468 = vmatprep.mubr.bf16.mxu0 %v171
    %2469 = vmatmul.mubr.bf16.gmra.mxu0 %v170
    %v2470 = vpop.f32.mrf.mxu0
    %v2471 = vadd.f32 %v1229, %v2470
    %v2472 = vpop.f32.mrf.mxu0
    %v2473 = vadd.f32 %v1231, %v2472
    %v2474 = vpop.f32.mrf.mxu0
    %v2475 = vadd.f32 %v1235, %v2474
    %v2476 = vpop.f32.mrf.mxu0
    %v2477 = vadd.f32 %v1237, %v2476
    %2478 = vmatprep.mubr.bf16.mxu0 %v177
    %2479 = vmatmul.mubr.bf16.gmra.mxu0 %v176
    %v2480 = vpop.f32.mrf.mxu0
    %v2481 = vadd.f32 %v1241, %v2480
    %v2482 = vpop.f32.mrf.mxu0
    %v2483 = vadd.f32 %v1243, %v2482
    %v2484 = vpop.f32.mrf.mxu0
    %v2485 = vadd.f32 %v1247, %v2484
    %v2486 = vpop.f32.mrf.mxu0
    %v2487 = vadd.f32 %v1249, %v2486
    %2488 = vmatprep.mubr.bf16.mxu0 %v183
    %2489 = vmatmul.mubr.bf16.gmra.mxu0 %v182
    %v2490 = vpop.f32.mrf.mxu0
    %v2491 = vadd.f32 %v1253, %v2490
    %v2492 = vpop.f32.mrf.mxu0
    %v2493 = vadd.f32 %v1255, %v2492
    %v2494 = vpop.f32.mrf.mxu0
    %v2495 = vadd.f32 %v1259, %v2494
    %v2496 = vpop.f32.mrf.mxu0
    %v2497 = vadd.f32 %v1261, %v2496
    %2498 = vmatprep.mubr.bf16.mxu0 %v189
    %2499 = vmatmul.mubr.bf16.gmra.mxu0 %v188
    %v2500 = vpop.f32.mrf.mxu0
    %v2501 = vadd.f32 %v1265, %v2500
    %v2502 = vpop.f32.mrf.mxu0
    %v2503 = vadd.f32 %v1267, %v2502
    %v2504 = vpop.f32.mrf.mxu0
    %v2505 = vadd.f32 %v1271, %v2504
    %v2506 = vpop.f32.mrf.mxu0
    %v2507 = vadd.f32 %v1273, %v2506
    %2508 = vdwg.mxu0
    %2509 = vmatprep.subr.bf16.mxu0 %v2105
    %2510 = vmatpush1.bf16.msra.mxu0 %v2104
    %2511 = vmatprep.subr.bf16.mxu0 %v2101
    %2512 = vmatpush1.bf16.msra.mxu0 %v2100
    %2513 = vmatprep.subr.bf16.mxu0 %v2097
    %2514 = vmatpush1.bf16.msra.mxu0 %v2096
    %2515 = vmatprep.subr.bf16.mxu0 %v2093
    %2516 = vmatpush1.bf16.msra.mxu0 %v2092
    %2517 = vmatprep.subr.bf16.mxu0 %v2089
    %2518 = vmatpush1.bf16.msra.mxu0 %v2088
    %2519 = vmatprep.subr.bf16.mxu0 %v2085
    %2520 = vmatpush1.bf16.msra.mxu0 %v2084
    %2521 = vmatprep.subr.bf16.mxu0 %v2081
    %2522 = vmatpush1.bf16.msra.mxu0 %v2080
    %2523 = vmatprep.subr.bf16.mxu0 %v2077
    %2524 = vmatpush1.bf16.msra.mxu0 %v2076
    %2525 = vmatprep.subr.bf16.mxu0 %v2137
    %2526 = vmatpush2.bf16.msra.mxu0 %v2136
    %2527 = vmatprep.subr.bf16.mxu0 %v2133
    %2528 = vmatpush2.bf16.msra.mxu0 %v2132
    %2529 = vmatprep.subr.bf16.mxu0 %v2129
    %2530 = vmatpush2.bf16.msra.mxu0 %v2128
    %2531 = vmatprep.subr.bf16.mxu0 %v2125
    %2532 = vmatpush2.bf16.msra.mxu0 %v2124
    %2533 = vmatprep.subr.bf16.mxu0 %v2121
    %2534 = vmatpush2.bf16.msra.mxu0 %v2120
    %2535 = vmatprep.subr.bf16.mxu0 %v2117
    %2536 = vmatpush2.bf16.msra.mxu0 %v2116
    %2537 = vmatprep.subr.bf16.mxu0 %v2113
    %2538 = vmatpush2.bf16.msra.mxu0 %v2112
    %2539 = vmatprep.subr.bf16.mxu0 %v2109
    %2540 = vmatpush2.bf16.msra.mxu0 %v2108
    %2541 = vmatprep.mubr.bf16.mxu0 %v149
    %2542 = vmatmul.mubr.bf16.gmra.mxu0 %v148
    %v2543 = vpop.f32.mrf.mxu0
    %v2544 = vadd.f32 %v2431, %v2543
    %v2545 = vpop.f32.mrf.mxu0
    %v2546 = vadd.f32 %v2433, %v2545
    %v2547 = vpop.f32.mrf.mxu0
    %v2548 = vadd.f32 %v2435, %v2547
    %v2549 = vpop.f32.mrf.mxu0
    %v2550 = vadd.f32 %v2437, %v2549
    %2551 = vmatprep.mubr.bf16.mxu0 %v155
    %2552 = vmatmul.mubr.bf16.gmra.mxu0 %v154
    %v2553 = vpop.f32.mrf.mxu0
    %v2554 = vadd.f32 %v2441, %v2553
    %v2555 = vpop.f32.mrf.mxu0
    %v2556 = vadd.f32 %v2443, %v2555
    %v2557 = vpop.f32.mrf.mxu0
    %v2558 = vadd.f32 %v2445, %v2557
    %v2559 = vpop.f32.mrf.mxu0
    %v2560 = vadd.f32 %v2447, %v2559
    %2561 = vmatprep.mubr.bf16.mxu0 %v161
    %2562 = vmatmul.mubr.bf16.gmra.mxu0 %v160
    %v2563 = vpop.f32.mrf.mxu0
    %v2564 = vadd.f32 %v2451, %v2563
    %v2565 = vpop.f32.mrf.mxu0
    %v2566 = vadd.f32 %v2453, %v2565
    %v2567 = vpop.f32.mrf.mxu0
    %v2568 = vadd.f32 %v2455, %v2567
    %v2569 = vpop.f32.mrf.mxu0
    %v2570 = vadd.f32 %v2457, %v2569
    %2571 = vmatprep.mubr.bf16.mxu0 %v167
    %2572 = vmatmul.mubr.bf16.gmra.mxu0 %v166
    %v2573 = vpop.f32.mrf.mxu0
    %v2574 = vadd.f32 %v2461, %v2573
    %v2575 = vpop.f32.mrf.mxu0
    %v2576 = vadd.f32 %v2463, %v2575
    %v2577 = vpop.f32.mrf.mxu0
    %v2578 = vadd.f32 %v2465, %v2577
    %v2579 = vpop.f32.mrf.mxu0
    %v2580 = vadd.f32 %v2467, %v2579
    %2581 = vmatprep.mubr.bf16.mxu0 %v173
    %2582 = vmatmul.mubr.bf16.gmra.mxu0 %v172
    %v2583 = vpop.f32.mrf.mxu0
    %v2584 = vadd.f32 %v2471, %v2583
    %v2585 = vpop.f32.mrf.mxu0
    %v2586 = vadd.f32 %v2473, %v2585
    %v2587 = vpop.f32.mrf.mxu0
    %v2588 = vadd.f32 %v2475, %v2587
    %v2589 = vpop.f32.mrf.mxu0
    %v2590 = vadd.f32 %v2477, %v2589
    %2591 = vmatprep.mubr.bf16.mxu0 %v179
    %2592 = vmatmul.mubr.bf16.gmra.mxu0 %v178
    %v2593 = vpop.f32.mrf.mxu0
    %v2594 = vadd.f32 %v2481, %v2593
    %v2595 = vpop.f32.mrf.mxu0
    %v2596 = vadd.f32 %v2483, %v2595
    %v2597 = vpop.f32.mrf.mxu0
    %v2598 = vadd.f32 %v2485, %v2597
    %v2599 = vpop.f32.mrf.mxu0
    %v2600 = vadd.f32 %v2487, %v2599
    %2601 = vmatprep.mubr.bf16.mxu0 %v185
    %2602 = vmatmul.mubr.bf16.gmra.mxu0 %v184
    %v2603 = vpop.f32.mrf.mxu0
    %v2604 = vadd.f32 %v2491, %v2603
    %v2605 = vpop.f32.mrf.mxu0
    %v2606 = vadd.f32 %v2493, %v2605
    %v2607 = vpop.f32.mrf.mxu0
    %v2608 = vadd.f32 %v2495, %v2607
    %v2609 = vpop.f32.mrf.mxu0
    %v2610 = vadd.f32 %v2497, %v2609
    %2611 = vmatprep.mubr.bf16.mxu0 %v191
    %2612 = vmatmul.mubr.bf16.gmra.mxu0 %v190
    %v2613 = vpop.f32.mrf.mxu0
    %v2614 = vadd.f32 %v2501, %v2613
    %v2615 = vpop.f32.mrf.mxu0
    %v2616 = vadd.f32 %v2503, %v2615
    %v2617 = vpop.f32.mrf.mxu0
    %v2618 = vadd.f32 %v2505, %v2617
    %v2619 = vpop.f32.mrf.mxu0
    %v2620 = vadd.f32 %v2507, %v2619
    %2621 = vdwg.mxu0
    %2622 = vmatprep.subr.bf16.mxu0 %v2169
    %2623 = vmatpush1.bf16.msra.mxu0 %v2168
    %2624 = vmatprep.subr.bf16.mxu0 %v2165
    %2625 = vmatpush1.bf16.msra.mxu0 %v2164
    %2626 = vmatprep.subr.bf16.mxu0 %v2161
    %2627 = vmatpush1.bf16.msra.mxu0 %v2160
    %2628 = vmatprep.subr.bf16.mxu0 %v2157
    %2629 = vmatpush1.bf16.msra.mxu0 %v2156
    %2630 = vmatprep.subr.bf16.mxu0 %v2153
    %2631 = vmatpush1.bf16.msra.mxu0 %v2152
    %2632 = vmatprep.subr.bf16.mxu0 %v2149
    %2633 = vmatpush1.bf16.msra.mxu0 %v2148
    %2634 = vmatprep.subr.bf16.mxu0 %v2145
    %2635 = vmatpush1.bf16.msra.mxu0 %v2144
    %2636 = vmatprep.subr.bf16.mxu0 %v2141
    %2637 = vmatpush1.bf16.msra.mxu0 %v2140
    %2638 = vmatprep.subr.bf16.mxu0 %v2201
    %2639 = vmatpush2.bf16.msra.mxu0 %v2200
    %2640 = vmatprep.subr.bf16.mxu0 %v2197
    %2641 = vmatpush2.bf16.msra.mxu0 %v2196
    %2642 = vmatprep.subr.bf16.mxu0 %v2193
    %2643 = vmatpush2.bf16.msra.mxu0 %v2192
    %2644 = vmatprep.subr.bf16.mxu0 %v2189
    %2645 = vmatpush2.bf16.msra.mxu0 %v2188
    %2646 = vmatprep.subr.bf16.mxu0 %v2185
    %2647 = vmatpush2.bf16.msra.mxu0 %v2184
    %2648 = vmatprep.subr.bf16.mxu0 %v2181
    %2649 = vmatpush2.bf16.msra.mxu0 %v2180
    %2650 = vmatprep.subr.bf16.mxu0 %v2177
    %2651 = vmatpush2.bf16.msra.mxu0 %v2176
    %2652 = vmatprep.subr.bf16.mxu0 %v2173
    %2653 = vmatpush2.bf16.msra.mxu0 %v2172
    %2654 = vmatprep.mubr.bf16.mxu0 %v151
    %2655 = vmatmul.mubr.bf16.gmra.mxu0 %v150
    %v2656 = vpop.f32.mrf.mxu0
    %v2657 = vadd.f32 %v2544, %v2656
    %v2658 = vpop.f32.mrf.mxu0
    %v2659 = vadd.f32 %v2546, %v2658
    %v2660 = vpop.f32.mrf.mxu0
    %v2661 = vadd.f32 %v2548, %v2660
    %v2662 = vpop.f32.mrf.mxu0
    %v2663 = vadd.f32 %v2550, %v2662
    %2664 = vmatprep.mubr.bf16.mxu0 %v157
    %2665 = vmatmul.mubr.bf16.gmra.mxu0 %v156
    %v2666 = vpop.f32.mrf.mxu0
    %v2667 = vadd.f32 %v2554, %v2666
    %v2668 = vpop.f32.mrf.mxu0
    %v2669 = vadd.f32 %v2556, %v2668
    %v2670 = vpop.f32.mrf.mxu0
    %v2671 = vadd.f32 %v2558, %v2670
    %v2672 = vpop.f32.mrf.mxu0
    %v2673 = vadd.f32 %v2560, %v2672
    %2674 = vmatprep.mubr.bf16.mxu0 %v163
    %2675 = vmatmul.mubr.bf16.gmra.mxu0 %v162
    %v2676 = vpop.f32.mrf.mxu0
    %v2677 = vadd.f32 %v2564, %v2676
    %v2678 = vpop.f32.mrf.mxu0
    %v2679 = vadd.f32 %v2566, %v2678
    %v2680 = vpop.f32.mrf.mxu0
    %v2681 = vadd.f32 %v2568, %v2680
    %v2682 = vpop.f32.mrf.mxu0
    %v2683 = vadd.f32 %v2570, %v2682
    %2684 = vmatprep.mubr.bf16.mxu0 %v169
    %2685 = vmatmul.mubr.bf16.gmra.mxu0 %v168
    %v2686 = vpop.f32.mrf.mxu0
    %v2687 = vadd.f32 %v2574, %v2686
    %v2688 = vpop.f32.mrf.mxu0
    %v2689 = vadd.f32 %v2576, %v2688
    %v2690 = vpop.f32.mrf.mxu0
    %v2691 = vadd.f32 %v2578, %v2690
    %v2692 = vpop.f32.mrf.mxu0
    %v2693 = vadd.f32 %v2580, %v2692
    %2694 = vmatprep.mubr.bf16.mxu0 %v175
    %2695 = vmatmul.mubr.bf16.gmra.mxu0 %v174
    %v2696 = vpop.f32.mrf.mxu0
    %v2697 = vadd.f32 %v2584, %v2696
    %v2698 = vpop.f32.mrf.mxu0
    %v2699 = vadd.f32 %v2586, %v2698
    %v2700 = vpop.f32.mrf.mxu0
    %v2701 = vadd.f32 %v2588, %v2700
    %v2702 = vpop.f32.mrf.mxu0
    %v2703 = vadd.f32 %v2590, %v2702
    %2704 = vmatprep.mubr.bf16.mxu0 %v181
    %2705 = vmatmul.mubr.bf16.gmra.mxu0 %v180
    %v2706 = vpop.f32.mrf.mxu0
    %v2707 = vadd.f32 %v2594, %v2706
    %v2708 = vpop.f32.mrf.mxu0
    %v2709 = vadd.f32 %v2596, %v2708
    %v2710 = vpop.f32.mrf.mxu0
    %v2711 = vadd.f32 %v2598, %v2710
    %v2712 = vpop.f32.mrf.mxu0
    %v2713 = vadd.f32 %v2600, %v2712
    %2714 = vmatprep.mubr.bf16.mxu0 %v187
    %2715 = vmatmul.mubr.bf16.gmra.mxu0 %v186
    %v2716 = vpop.f32.mrf.mxu0
    %v2717 = vadd.f32 %v2604, %v2716
    %v2718 = vpop.f32.mrf.mxu0
    %v2719 = vadd.f32 %v2606, %v2718
    %v2720 = vpop.f32.mrf.mxu0
    %v2721 = vadd.f32 %v2608, %v2720
    %v2722 = vpop.f32.mrf.mxu0
    %v2723 = vadd.f32 %v2610, %v2722
    %2724 = vmatprep.mubr.bf16.mxu0 %v193
    %2725 = vmatmul.mubr.bf16.gmra.mxu0 %v192
    %v2726 = vpop.f32.mrf.mxu0
    %v2727 = vadd.f32 %v2614, %v2726
    %v2728 = vpop.f32.mrf.mxu0
    %v2729 = vadd.f32 %v2616, %v2728
    %v2730 = vpop.f32.mrf.mxu0
    %v2731 = vadd.f32 %v2618, %v2730
    %v2732 = vpop.f32.mrf.mxu0
    %v2733 = vadd.f32 %v2620, %v2732
    %2734 = vdwg.mxu0
    %2735 = vmatprep.subr.bf16.mxu0 %v2043
    %2736 = vmatpush1.bf16.msra.mxu0 %v2042
    %2737 = vmatprep.subr.bf16.mxu0 %v2039
    %2738 = vmatpush1.bf16.msra.mxu0 %v2038
    %2739 = vmatprep.subr.bf16.mxu0 %v2035
    %2740 = vmatpush1.bf16.msra.mxu0 %v2034
    %2741 = vmatprep.subr.bf16.mxu0 %v2031
    %2742 = vmatpush1.bf16.msra.mxu0 %v2030
    %2743 = vmatprep.subr.bf16.mxu0 %v2027
    %2744 = vmatpush1.bf16.msra.mxu0 %v2026
    %2745 = vmatprep.subr.bf16.mxu0 %v2023
    %2746 = vmatpush1.bf16.msra.mxu0 %v2022
    %2747 = vmatprep.subr.bf16.mxu0 %v2019
    %2748 = vmatpush1.bf16.msra.mxu0 %v2018
    %2749 = vmatprep.subr.bf16.mxu0 %v2015
    %2750 = vmatpush1.bf16.msra.mxu0 %v2014
    %2751 = vmatprep.subr.bf16.mxu0 %v2075
    %2752 = vmatpush2.bf16.msra.mxu0 %v2074
    %2753 = vmatprep.subr.bf16.mxu0 %v2071
    %2754 = vmatpush2.bf16.msra.mxu0 %v2070
    %2755 = vmatprep.subr.bf16.mxu0 %v2067
    %2756 = vmatpush2.bf16.msra.mxu0 %v2066
    %2757 = vmatprep.subr.bf16.mxu0 %v2063
    %2758 = vmatpush2.bf16.msra.mxu0 %v2062
    %2759 = vmatprep.subr.bf16.mxu0 %v2059
    %2760 = vmatpush2.bf16.msra.mxu0 %v2058
    %2761 = vmatprep.subr.bf16.mxu0 %v2055
    %2762 = vmatpush2.bf16.msra.mxu0 %v2054
    %2763 = vmatprep.subr.bf16.mxu0 %v2051
    %2764 = vmatpush2.bf16.msra.mxu0 %v2050
    %2765 = vmatprep.subr.bf16.mxu0 %v2047
    %2766 = vmatpush2.bf16.msra.mxu0 %v2046
    %2767 = vmatprep.mubr.bf16.mxu0 %v147
    %2768 = vmatmul.mubr.bf16.gmra.mxu0 %v146
    %v2769 = vpop.f32.mrf.mxu0
    %v2770 = vadd.f32 %v1342, %v2769
    %v2771 = vpop.f32.mrf.mxu0
    %v2772 = vadd.f32 %v1344, %v2771
    %v2773 = vpop.f32.mrf.mxu0
    %v2774 = vadd.f32 %v1348, %v2773
    %v2775 = vpop.f32.mrf.mxu0
    %v2776 = vadd.f32 %v1350, %v2775
    %2777 = vmatprep.mubr.bf16.mxu0 %v153
    %2778 = vmatmul.mubr.bf16.gmra.mxu0 %v152
    %v2779 = vpop.f32.mrf.mxu0
    %v2780 = vadd.f32 %v1354, %v2779
    %v2781 = vpop.f32.mrf.mxu0
    %v2782 = vadd.f32 %v1356, %v2781
    %v2783 = vpop.f32.mrf.mxu0
    %v2784 = vadd.f32 %v1360, %v2783
    %v2785 = vpop.f32.mrf.mxu0
    %v2786 = vadd.f32 %v1362, %v2785
    %2787 = vmatprep.mubr.bf16.mxu0 %v159
    %2788 = vmatmul.mubr.bf16.gmra.mxu0 %v158
    %v2789 = vpop.f32.mrf.mxu0
    %v2790 = vadd.f32 %v1366, %v2789
    %v2791 = vpop.f32.mrf.mxu0
    %v2792 = vadd.f32 %v1368, %v2791
    %v2793 = vpop.f32.mrf.mxu0
    %v2794 = vadd.f32 %v1372, %v2793
    %v2795 = vpop.f32.mrf.mxu0
    %v2796 = vadd.f32 %v1374, %v2795
    %2797 = vmatprep.mubr.bf16.mxu0 %v165
    %2798 = vmatmul.mubr.bf16.gmra.mxu0 %v164
    %v2799 = vpop.f32.mrf.mxu0
    %v2800 = vadd.f32 %v1378, %v2799
    %v2801 = vpop.f32.mrf.mxu0
    %v2802 = vadd.f32 %v1380, %v2801
    %v2803 = vpop.f32.mrf.mxu0
    %v2804 = vadd.f32 %v1384, %v2803
    %v2805 = vpop.f32.mrf.mxu0
    %v2806 = vadd.f32 %v1386, %v2805
    %2807 = vmatprep.mubr.bf16.mxu0 %v171
    %2808 = vmatmul.mubr.bf16.gmra.mxu0 %v170
    %v2809 = vpop.f32.mrf.mxu0
    %v2810 = vadd.f32 %v1390, %v2809
    %v2811 = vpop.f32.mrf.mxu0
    %v2812 = vadd.f32 %v1392, %v2811
    %v2813 = vpop.f32.mrf.mxu0
    %v2814 = vadd.f32 %v1396, %v2813
    %v2815 = vpop.f32.mrf.mxu0
    %v2816 = vadd.f32 %v1398, %v2815
    %2817 = vmatprep.mubr.bf16.mxu0 %v177
    %2818 = vmatmul.mubr.bf16.gmra.mxu0 %v176
    %v2819 = vpop.f32.mrf.mxu0
    %v2820 = vadd.f32 %v1402, %v2819
    %v2821 = vpop.f32.mrf.mxu0
    %v2822 = vadd.f32 %v1404, %v2821
    %v2823 = vpop.f32.mrf.mxu0
    %v2824 = vadd.f32 %v1408, %v2823
    %v2825 = vpop.f32.mrf.mxu0
    %v2826 = vadd.f32 %v1410, %v2825
    %2827 = vmatprep.mubr.bf16.mxu0 %v183
    %2828 = vmatmul.mubr.bf16.gmra.mxu0 %v182
    %v2829 = vpop.f32.mrf.mxu0
    %v2830 = vadd.f32 %v1414, %v2829
    %v2831 = vpop.f32.mrf.mxu0
    %v2832 = vadd.f32 %v1416, %v2831
    %v2833 = vpop.f32.mrf.mxu0
    %v2834 = vadd.f32 %v1420, %v2833
    %v2835 = vpop.f32.mrf.mxu0
    %v2836 = vadd.f32 %v1422, %v2835
    %2837 = vmatprep.mubr.bf16.mxu0 %v189
    %2838 = vmatmul.mubr.bf16.gmra.mxu0 %v188
    %v2839 = vpop.f32.mrf.mxu0
    %v2840 = vadd.f32 %v1426, %v2839
    %v2841 = vpop.f32.mrf.mxu0
    %v2842 = vadd.f32 %v1428, %v2841
    %v2843 = vpop.f32.mrf.mxu0
    %v2844 = vadd.f32 %v1432, %v2843
    %v2845 = vpop.f32.mrf.mxu0
    %v2846 = vadd.f32 %v1434, %v2845
    %2847 = vdwg.mxu0
    %2848 = vmatprep.subr.bf16.mxu0 %v2107
    %2849 = vmatpush1.bf16.msra.mxu0 %v2106
    %2850 = vmatprep.subr.bf16.mxu0 %v2103
    %2851 = vmatpush1.bf16.msra.mxu0 %v2102
    %2852 = vmatprep.subr.bf16.mxu0 %v2099
    %2853 = vmatpush1.bf16.msra.mxu0 %v2098
    %2854 = vmatprep.subr.bf16.mxu0 %v2095
    %2855 = vmatpush1.bf16.msra.mxu0 %v2094
    %2856 = vmatprep.subr.bf16.mxu0 %v2091
    %2857 = vmatpush1.bf16.msra.mxu0 %v2090
    %2858 = vmatprep.subr.bf16.mxu0 %v2087
    %2859 = vmatpush1.bf16.msra.mxu0 %v2086
    %2860 = vmatprep.subr.bf16.mxu0 %v2083
    %2861 = vmatpush1.bf16.msra.mxu0 %v2082
    %2862 = vmatprep.subr.bf16.mxu0 %v2079
    %2863 = vmatpush1.bf16.msra.mxu0 %v2078
    %2864 = vmatprep.subr.bf16.mxu0 %v2139
    %2865 = vmatpush2.bf16.msra.mxu0 %v2138
    %2866 = vmatprep.subr.bf16.mxu0 %v2135
    %2867 = vmatpush2.bf16.msra.mxu0 %v2134
    %2868 = vmatprep.subr.bf16.mxu0 %v2131
    %2869 = vmatpush2.bf16.msra.mxu0 %v2130
    %2870 = vmatprep.subr.bf16.mxu0 %v2127
    %2871 = vmatpush2.bf16.msra.mxu0 %v2126
    %2872 = vmatprep.subr.bf16.mxu0 %v2123
    %2873 = vmatpush2.bf16.msra.mxu0 %v2122
    %2874 = vmatprep.subr.bf16.mxu0 %v2119
    %2875 = vmatpush2.bf16.msra.mxu0 %v2118
    %2876 = vmatprep.subr.bf16.mxu0 %v2115
    %2877 = vmatpush2.bf16.msra.mxu0 %v2114
    %2878 = vmatprep.subr.bf16.mxu0 %v2111
    %2879 = vmatpush2.bf16.msra.mxu0 %v2110
    %2880 = vmatprep.mubr.bf16.mxu0 %v149
    %2881 = vmatmul.mubr.bf16.gmra.mxu0 %v148
    %v2882 = vpop.f32.mrf.mxu0
    %v2883 = vadd.f32 %v2770, %v2882
    %v2884 = vpop.f32.mrf.mxu0
    %v2885 = vadd.f32 %v2772, %v2884
    %v2886 = vpop.f32.mrf.mxu0
    %v2887 = vadd.f32 %v2774, %v2886
    %v2888 = vpop.f32.mrf.mxu0
    %v2889 = vadd.f32 %v2776, %v2888
    %2890 = vmatprep.mubr.bf16.mxu0 %v155
    %2891 = vmatmul.mubr.bf16.gmra.mxu0 %v154
    %v2892 = vpop.f32.mrf.mxu0
    %v2893 = vadd.f32 %v2780, %v2892
    %v2894 = vpop.f32.mrf.mxu0
    %v2895 = vadd.f32 %v2782, %v2894
    %v2896 = vpop.f32.mrf.mxu0
    %v2897 = vadd.f32 %v2784, %v2896
    %v2898 = vpop.f32.mrf.mxu0
    %v2899 = vadd.f32 %v2786, %v2898
    %2900 = vmatprep.mubr.bf16.mxu0 %v161
    %2901 = vmatmul.mubr.bf16.gmra.mxu0 %v160
    %v2902 = vpop.f32.mrf.mxu0
    %v2903 = vadd.f32 %v2790, %v2902
    %v2904 = vpop.f32.mrf.mxu0
    %v2905 = vadd.f32 %v2792, %v2904
    %v2906 = vpop.f32.mrf.mxu0
    %v2907 = vadd.f32 %v2794, %v2906
    %v2908 = vpop.f32.mrf.mxu0
    %v2909 = vadd.f32 %v2796, %v2908
    %2910 = vmatprep.mubr.bf16.mxu0 %v167
    %2911 = vmatmul.mubr.bf16.gmra.mxu0 %v166
    %v2912 = vpop.f32.mrf.mxu0
    %v2913 = vadd.f32 %v2800, %v2912
    %v2914 = vpop.f32.mrf.mxu0
    %v2915 = vadd.f32 %v2802, %v2914
    %v2916 = vpop.f32.mrf.mxu0
    %v2917 = vadd.f32 %v2804, %v2916
    %v2918 = vpop.f32.mrf.mxu0
    %v2919 = vadd.f32 %v2806, %v2918
    %2920 = vmatprep.mubr.bf16.mxu0 %v173
    %2921 = vmatmul.mubr.bf16.gmra.mxu0 %v172
    %v2922 = vpop.f32.mrf.mxu0
    %v2923 = vadd.f32 %v2810, %v2922
    %v2924 = vpop.f32.mrf.mxu0
    %v2925 = vadd.f32 %v2812, %v2924
    %v2926 = vpop.f32.mrf.mxu0
    %v2927 = vadd.f32 %v2814, %v2926
    %v2928 = vpop.f32.mrf.mxu0
    %v2929 = vadd.f32 %v2816, %v2928
    %2930 = vmatprep.mubr.bf16.mxu0 %v179
    %2931 = vmatmul.mubr.bf16.gmra.mxu0 %v178
    %v2932 = vpop.f32.mrf.mxu0
    %v2933 = vadd.f32 %v2820, %v2932
    %v2934 = vpop.f32.mrf.mxu0
    %v2935 = vadd.f32 %v2822, %v2934
    %v2936 = vpop.f32.mrf.mxu0
    %v2937 = vadd.f32 %v2824, %v2936
    %v2938 = vpop.f32.mrf.mxu0
    %v2939 = vadd.f32 %v2826, %v2938
    %2940 = vmatprep.mubr.bf16.mxu0 %v185
    %2941 = vmatmul.mubr.bf16.gmra.mxu0 %v184
    %v2942 = vpop.f32.mrf.mxu0
    %v2943 = vadd.f32 %v2830, %v2942
    %v2944 = vpop.f32.mrf.mxu0
    %v2945 = vadd.f32 %v2832, %v2944
    %v2946 = vpop.f32.mrf.mxu0
    %v2947 = vadd.f32 %v2834, %v2946
    %v2948 = vpop.f32.mrf.mxu0
    %v2949 = vadd.f32 %v2836, %v2948
    %2950 = vmatprep.mubr.bf16.mxu0 %v191
    %2951 = vmatmul.mubr.bf16.gmra.mxu0 %v190
    %v2952 = vpop.f32.mrf.mxu0
    %v2953 = vadd.f32 %v2840, %v2952
    %v2954 = vpop.f32.mrf.mxu0
    %v2955 = vadd.f32 %v2842, %v2954
    %v2956 = vpop.f32.mrf.mxu0
    %v2957 = vadd.f32 %v2844, %v2956
    %v2958 = vpop.f32.mrf.mxu0
    %v2959 = vadd.f32 %v2846, %v2958
    %2960 = vdwg.mxu0
    %2961 = vmatprep.subr.bf16.mxu0 %v2171
    %2962 = vmatpush1.bf16.msra.mxu0 %v2170
    %2963 = vmatprep.subr.bf16.mxu0 %v2167
    %2964 = vmatpush1.bf16.msra.mxu0 %v2166
    %2965 = vmatprep.subr.bf16.mxu0 %v2163
    %2966 = vmatpush1.bf16.msra.mxu0 %v2162
    %2967 = vmatprep.subr.bf16.mxu0 %v2159
    %2968 = vmatpush1.bf16.msra.mxu0 %v2158
    %2969 = vmatprep.subr.bf16.mxu0 %v2155
    %2970 = vmatpush1.bf16.msra.mxu0 %v2154
    %2971 = vmatprep.subr.bf16.mxu0 %v2151
    %2972 = vmatpush1.bf16.msra.mxu0 %v2150
    %2973 = vmatprep.subr.bf16.mxu0 %v2147
    %2974 = vmatpush1.bf16.msra.mxu0 %v2146
    %2975 = vmatprep.subr.bf16.mxu0 %v2143
    %2976 = vmatpush1.bf16.msra.mxu0 %v2142
    %2977 = vmatprep.subr.bf16.mxu0 %v2203
    %2978 = vmatpush2.bf16.msra.mxu0 %v2202
    %2979 = vmatprep.subr.bf16.mxu0 %v2199
    %2980 = vmatpush2.bf16.msra.mxu0 %v2198
    %2981 = vmatprep.subr.bf16.mxu0 %v2195
    %2982 = vmatpush2.bf16.msra.mxu0 %v2194
    %2983 = vmatprep.subr.bf16.mxu0 %v2191
    %2984 = vmatpush2.bf16.msra.mxu0 %v2190
    %2985 = vmatprep.subr.bf16.mxu0 %v2187
    %2986 = vmatpush2.bf16.msra.mxu0 %v2186
    %2987 = vmatprep.subr.bf16.mxu0 %v2183
    %2988 = vmatpush2.bf16.msra.mxu0 %v2182
    %2989 = vmatprep.subr.bf16.mxu0 %v2179
    %2990 = vmatpush2.bf16.msra.mxu0 %v2178
    %2991 = vmatprep.subr.bf16.mxu0 %v2175
    %2992 = vmatpush2.bf16.msra.mxu0 %v2174
    %2993 = vmatprep.mubr.bf16.mxu0 %v151
    %2994 = vmatmul.mubr.bf16.gmra.mxu0 %v150
    %v2995 = vpop.f32.mrf.mxu0
    %v2996 = vadd.f32 %v2883, %v2995
    %v2997 = vpop.f32.mrf.mxu0
    %v2998 = vadd.f32 %v2885, %v2997
    %v2999 = vpop.f32.mrf.mxu0
    %v3000 = vadd.f32 %v2887, %v2999
    %v3001 = vpop.f32.mrf.mxu0
    %v3002 = vadd.f32 %v2889, %v3001
    %3003 = vmatprep.mubr.bf16.mxu0 %v157
    %3004 = vmatmul.mubr.bf16.gmra.mxu0 %v156
    %v3005 = vpop.f32.mrf.mxu0
    %v3006 = vadd.f32 %v2893, %v3005
    %v3007 = vpop.f32.mrf.mxu0
    %v3008 = vadd.f32 %v2895, %v3007
    %v3009 = vpop.f32.mrf.mxu0
    %v3010 = vadd.f32 %v2897, %v3009
    %v3011 = vpop.f32.mrf.mxu0
    %v3012 = vadd.f32 %v2899, %v3011
    %3013 = vmatprep.mubr.bf16.mxu0 %v163
    %3014 = vmatmul.mubr.bf16.gmra.mxu0 %v162
    %v3015 = vpop.f32.mrf.mxu0
    %v3016 = vadd.f32 %v2903, %v3015
    %v3017 = vpop.f32.mrf.mxu0
    %v3018 = vadd.f32 %v2905, %v3017
    %v3019 = vpop.f32.mrf.mxu0
    %v3020 = vadd.f32 %v2907, %v3019
    %v3021 = vpop.f32.mrf.mxu0
    %v3022 = vadd.f32 %v2909, %v3021
    %3023 = vmatprep.mubr.bf16.mxu0 %v169
    %3024 = vmatmul.mubr.bf16.gmra.mxu0 %v168
    %v3025 = vpop.f32.mrf.mxu0
    %v3026 = vadd.f32 %v2913, %v3025
    %v3027 = vpop.f32.mrf.mxu0
    %v3028 = vadd.f32 %v2915, %v3027
    %v3029 = vpop.f32.mrf.mxu0
    %v3030 = vadd.f32 %v2917, %v3029
    %v3031 = vpop.f32.mrf.mxu0
    %v3032 = vadd.f32 %v2919, %v3031
    %3033 = vmatprep.mubr.bf16.mxu0 %v175
    %3034 = vmatmul.mubr.bf16.gmra.mxu0 %v174
    %v3035 = vpop.f32.mrf.mxu0
    %v3036 = vadd.f32 %v2923, %v3035
    %v3037 = vpop.f32.mrf.mxu0
    %v3038 = vadd.f32 %v2925, %v3037
    %v3039 = vpop.f32.mrf.mxu0
    %v3040 = vadd.f32 %v2927, %v3039
    %v3041 = vpop.f32.mrf.mxu0
    %v3042 = vadd.f32 %v2929, %v3041
    %3043 = vmatprep.mubr.bf16.mxu0 %v181
    %3044 = vmatmul.mubr.bf16.gmra.mxu0 %v180
    %v3045 = vpop.f32.mrf.mxu0
    %v3046 = vadd.f32 %v2933, %v3045
    %v3047 = vpop.f32.mrf.mxu0
    %v3048 = vadd.f32 %v2935, %v3047
    %v3049 = vpop.f32.mrf.mxu0
    %v3050 = vadd.f32 %v2937, %v3049
    %v3051 = vpop.f32.mrf.mxu0
    %v3052 = vadd.f32 %v2939, %v3051
    %3053 = vmatprep.mubr.bf16.mxu0 %v187
    %3054 = vmatmul.mubr.bf16.gmra.mxu0 %v186
    %v3055 = vpop.f32.mrf.mxu0
    %v3056 = vadd.f32 %v2943, %v3055
    %v3057 = vpop.f32.mrf.mxu0
    %v3058 = vadd.f32 %v2945, %v3057
    %v3059 = vpop.f32.mrf.mxu0
    %v3060 = vadd.f32 %v2947, %v3059
    %v3061 = vpop.f32.mrf.mxu0
    %v3062 = vadd.f32 %v2949, %v3061
    %3063 = vmatprep.mubr.bf16.mxu0 %v193
    %3064 = vmatmul.mubr.bf16.gmra.mxu0 %v192
    %v3065 = vpop.f32.mrf.mxu0
    %v3066 = vadd.f32 %v2953, %v3065
    %v3067 = vpop.f32.mrf.mxu0
    %v3068 = vadd.f32 %v2955, %v3067
    %v3069 = vpop.f32.mrf.mxu0
    %v3070 = vadd.f32 %v2957, %v3069
    %v3071 = vpop.f32.mrf.mxu0
    %v3072 = vadd.f32 %v2959, %v3071
    %3073 = vdwg.mxu0
    %v3074 = vld [vmem:[%s2] sm:$0xf]
    %v3076 = vlaneseq
    %v3077 = vshrl.u32 %v3076, 7
    %v3078 = vsub.s32 0, %v3077
    %v3079 = vrot.slane %v3074, %v3078
    %v3080 = vlaneseq
    %v3081 = vshrl.u32 %v3080, 7
    %v3082 = vsub.s32 1, %v3081
    %v3083 = vrot.slane %v3074, %v3082
    %v3084 = vlaneseq
    %v3085 = vshrl.u32 %v3084, 7
    %v3086 = vsub.s32 2, %v3085
    %v3087 = vrot.slane %v3074, %v3086
    %v3088 = vlaneseq
    %v3089 = vshrl.u32 %v3088, 7
    %v3090 = vsub.s32 3, %v3089
    %v3091 = vrot.slane %v3074, %v3090
    %v3096 = vadd.f32 %v2657, %v3079
    %v3097 = vadd.f32 %v2659, %v3083
    %v3098 = vadd.f32 %v2996, %v3087
    %v3099 = vadd.f32 %v2998, %v3091
    %v3100 = vadd.f32 %v2661, %v3079
    %v3101 = vadd.f32 %v2663, %v3083
    %v3102 = vadd.f32 %v3000, %v3087
    %v3103 = vadd.f32 %v3002, %v3091
    %v3104 = vadd.f32 %v2667, %v3079
    %v3105 = vadd.f32 %v2669, %v3083
    %v3106 = vadd.f32 %v3006, %v3087
    %v3107 = vadd.f32 %v3008, %v3091
    %v3108 = vadd.f32 %v2671, %v3079
    %v3109 = vadd.f32 %v2673, %v3083
    %v3110 = vadd.f32 %v3010, %v3087
    %v3111 = vadd.f32 %v3012, %v3091
    %v3112 = vadd.f32 %v2677, %v3079
    %v3113 = vadd.f32 %v2679, %v3083
    %v3114 = vadd.f32 %v3016, %v3087
    %v3115 = vadd.f32 %v3018, %v3091
    %v3116 = vadd.f32 %v2681, %v3079
    %v3117 = vadd.f32 %v2683, %v3083
    %v3118 = vadd.f32 %v3020, %v3087
    %v3119 = vadd.f32 %v3022, %v3091
    %v3120 = vadd.f32 %v2687, %v3079
    %v3121 = vadd.f32 %v2689, %v3083
    %v3122 = vadd.f32 %v3026, %v3087
    %v3123 = vadd.f32 %v3028, %v3091
    %v3124 = vadd.f32 %v2691, %v3079
    %v3125 = vadd.f32 %v2693, %v3083
    %v3126 = vadd.f32 %v3030, %v3087
    %v3127 = vadd.f32 %v3032, %v3091
    %v3128 = vadd.f32 %v2697, %v3079
    %v3129 = vadd.f32 %v2699, %v3083
    %v3130 = vadd.f32 %v3036, %v3087
    %v3131 = vadd.f32 %v3038, %v3091
    %v3132 = vadd.f32 %v2701, %v3079
    %v3133 = vadd.f32 %v2703, %v3083
    %v3134 = vadd.f32 %v3040, %v3087
    %v3135 = vadd.f32 %v3042, %v3091
    %v3136 = vadd.f32 %v2707, %v3079
    %v3137 = vadd.f32 %v2709, %v3083
    %v3138 = vadd.f32 %v3046, %v3087
    %v3139 = vadd.f32 %v3048, %v3091
    %v3140 = vadd.f32 %v2711, %v3079
    %v3141 = vadd.f32 %v2713, %v3083
    %v3142 = vadd.f32 %v3050, %v3087
    %v3143 = vadd.f32 %v3052, %v3091
    %v3144 = vadd.f32 %v2717, %v3079
    %v3145 = vadd.f32 %v2719, %v3083
    %v3146 = vadd.f32 %v3056, %v3087
    %v3147 = vadd.f32 %v3058, %v3091
    %v3148 = vadd.f32 %v2721, %v3079
    %v3149 = vadd.f32 %v2723, %v3083
    %v3150 = vadd.f32 %v3060, %v3087
    %v3151 = vadd.f32 %v3062, %v3091
    %v3152 = vadd.f32 %v2727, %v3079
    %v3153 = vadd.f32 %v2729, %v3083
    %v3154 = vadd.f32 %v3066, %v3087
    %v3155 = vadd.f32 %v3068, %v3091
    %v3156 = vadd.f32 %v2731, %v3079
    %v3157 = vadd.f32 %v2733, %v3083
    %v3158 = vadd.f32 %v3070, %v3087
    %v3159 = vadd.f32 %v3072, %v3091
    %3160 = vst [vmem:[#allocation7] sm:$0xff] %v3096
    %3161 = vst [vmem:[#allocation7 + $0x8] sm:$0xff] %v3097
    %3162 = vst [vmem:[#allocation7 + $0x10] sm:$0xff] %v3098
    %3163 = vst [vmem:[#allocation7 + $0x18] sm:$0xff] %v3099
    %3164 = vst [vmem:[#allocation7 + $0x20] sm:$0xff] %v3100
    %3165 = vst [vmem:[#allocation7 + $0x28] sm:$0xff] %v3101
    %3166 = vst [vmem:[#allocation7 + $0x30] sm:$0xff] %v3102
    %3167 = vst [vmem:[#allocation7 + $0x38] sm:$0xff] %v3103
    %3168 = vst [vmem:[#allocation7 + $0x40] sm:$0xff] %v3104
    %3169 = vst [vmem:[#allocation7 + $0x48] sm:$0xff] %v3105
    %3170 = vst [vmem:[#allocation7 + $0x50] sm:$0xff] %v3106
    %3171 = vst [vmem:[#allocation7 + $0x58] sm:$0xff] %v3107
    %3172 = vst [vmem:[#allocation7 + $0x60] sm:$0xff] %v3108
    %3173 = vst [vmem:[#allocation7 + $0x68] sm:$0xff] %v3109
    %3174 = vst [vmem:[#allocation7 + $0x70] sm:$0xff] %v3110
    %3175 = vst [vmem:[#allocation7 + $0x78] sm:$0xff] %v3111
    %3176 = vst [vmem:[#allocation7 + $0x80] sm:$0xff] %v3112
    %3177 = vst [vmem:[#allocation7 + $0x88] sm:$0xff] %v3113
    %3178 = vst [vmem:[#allocation7 + $0x90] sm:$0xff] %v3114
    %3179 = vst [vmem:[#allocation7 + $0x98] sm:$0xff] %v3115
    %3180 = vst [vmem:[#allocation7 + $0xa0] sm:$0xff] %v3116
    %3181 = vst [vmem:[#allocation7 + $0xa8] sm:$0xff] %v3117
    %3182 = vst [vmem:[#allocation7 + $0xb0] sm:$0xff] %v3118
    %3183 = vst [vmem:[#allocation7 + $0xb8] sm:$0xff] %v3119
    %3184 = vst [vmem:[#allocation7 + $0xc0] sm:$0xff] %v3120
    %3185 = vst [vmem:[#allocation7 + $0xc8] sm:$0xff] %v3121
    %3186 = vst [vmem:[#allocation7 + $0xd0] sm:$0xff] %v3122
    %3187 = vst [vmem:[#allocation7 + $0xd8] sm:$0xff] %v3123
    %3188 = vst [vmem:[#allocation7 + $0xe0] sm:$0xff] %v3124
    %3189 = vst [vmem:[#allocation7 + $0xe8] sm:$0xff] %v3125
    %3190 = vst [vmem:[#allocation7 + $0xf0] sm:$0xff] %v3126
    %3191 = vst [vmem:[#allocation7 + $0xf8] sm:$0xff] %v3127
    %3192 = vst [vmem:[#allocation7 + $0x100] sm:$0xff] %v3128
    %3193 = vst [vmem:[#allocation7 + $0x108] sm:$0xff] %v3129
    %3194 = vst [vmem:[#allocation7 + $0x110] sm:$0xff] %v3130
    %3195 = vst [vmem:[#allocation7 + $0x118] sm:$0xff] %v3131
    %3196 = vst [vmem:[#allocation7 + $0x120] sm:$0xff] %v3132
    %3197 = vst [vmem:[#allocation7 + $0x128] sm:$0xff] %v3133
    %3198 = vst [vmem:[#allocation7 + $0x130] sm:$0xff] %v3134
    %3199 = vst [vmem:[#allocation7 + $0x138] sm:$0xff] %v3135
    %3200 = vst [vmem:[#allocation7 + $0x140] sm:$0xff] %v3136
    %3201 = vst [vmem:[#allocation7 + $0x148] sm:$0xff] %v3137
    %3202 = vst [vmem:[#allocation7 + $0x150] sm:$0xff] %v3138
    %3203 = vst [vmem:[#allocation7 + $0x158] sm:$0xff] %v3139
    %3204 = vst [vmem:[#allocation7 + $0x160] sm:$0xff] %v3140
    %3205 = vst [vmem:[#allocation7 + $0x168] sm:$0xff] %v3141
    %3206 = vst [vmem:[#allocation7 + $0x170] sm:$0xff] %v3142
    %3207 = vst [vmem:[#allocation7 + $0x178] sm:$0xff] %v3143
    %3208 = vst [vmem:[#allocation7 + $0x180] sm:$0xff] %v3144
    %3209 = vst [vmem:[#allocation7 + $0x188] sm:$0xff] %v3145
    %3210 = vst [vmem:[#allocation7 + $0x190] sm:$0xff] %v3146
    %3211 = vst [vmem:[#allocation7 + $0x198] sm:$0xff] %v3147
    %3212 = vst [vmem:[#allocation7 + $0x1a0] sm:$0xff] %v3148
    %3213 = vst [vmem:[#allocation7 + $0x1a8] sm:$0xff] %v3149
    %3214 = vst [vmem:[#allocation7 + $0x1b0] sm:$0xff] %v3150
    %3215 = vst [vmem:[#allocation7 + $0x1b8] sm:$0xff] %v3151
    %3216 = vst [vmem:[#allocation7 + $0x1c0] sm:$0xff] %v3152
    %3217 = vst [vmem:[#allocation7 + $0x1c8] sm:$0xff] %v3153
    %3218 = vst [vmem:[#allocation7 + $0x1d0] sm:$0xff] %v3154
    %3219 = vst [vmem:[#allocation7 + $0x1d8] sm:$0xff] %v3155
    %3220 = vst [vmem:[#allocation7 + $0x1e0] sm:$0xff] %v3156
    %3221 = vst [vmem:[#allocation7 + $0x1e8] sm:$0xff] %v3157
    %3222 = vst [vmem:[#allocation7 + $0x1f0] sm:$0xff] %v3158
    %3223 = vst [vmem:[#allocation7 + $0x1f8] sm:$0xff] %v3159
    // Predicated region
    $region30: #{tpu_custom_call.1} parent=1 // pred_check
      _
    $region31: #{tpu_custom_call.1} parent=1 // pred_check_branch
      %3225 = sbr.rel (0) target = $region33
    $region32: #{tpu_custom_call.1} parent=1 // pred_region
      %s3227 = ssub.s32 8192, 8192
      %3228 = vsyncadd [#allocation4], %s3227
      %s3229 = sshll.u32 [#allocation7], 4
      %s3230 = int_to_ptr.vmem [resolvable:$true] %s3229
      %3235 = dma.vmem_to_hbm [thread:$0]  %s3230, 8192, %s5, [#allocation4], 512, 512, 32
    $region33: #{tpu_custom_call.1} parent=1 // pred_fallthru
      _
    // Predicated region
    $region34: #{tpu_custom_call.1} parent=1 // pred_check
      _
    $region35: #{tpu_custom_call.1} parent=1 // pred_check_branch
      %3237 = sbr.rel (0) target = $region37
    $region36: #{tpu_custom_call.1} parent=1 // pred_region
      %3238 = dma.done [#allocation4], 8192
    $region37: #{tpu_custom_call.1} parent=1 // pred_fallthru
      _
    %3239 = vsyncpa [#allocation3], 1
    %3240 = vsyncpa [#allocation6], 1
    %3241 = vsyncpa [#allocation4], 1

</llo_original>
